<compile_context>
chip_gen: v7x
topology: tpu7x:2x2x1
jax: 0.10.0
libtpu: 0.0.40
codegen_flags: <defaults>
</compile_context>

<pallas_src>
import jax
import jax.numpy as jnp
import numpy as np
from jax.experimental import pallas as pl
from jax.experimental.pallas import tpu as pltpu


def _silu(x):
    return x * jax.nn.sigmoid(x)


def m2c_kernel(xp_ref, xh_ref, w1_ref, b1_ref, w2_ref, b2_ref, o_ref):
    # xp_ref: (4, Th, Wo, C1) bf16 -- phases of one batch / one row-tile,
    #         phase index = 2*row_parity + col_parity : [00, 01, 10, 11]
    # xh_ref: (2, 1, Wo, C1) bf16 -- halo row (phase row i*Th - 1) of phases 10, 11
    # w1_ref: (C1, Cm) bf16, b1_ref: (1, Cm) f32        folded cv1 (BN fused)
    # w2_ref: (9*Cm, Cm) bf16, b2_ref: (1, Cm) f32      folded cv2, rows tap-major
    # o_ref : (2, Th, Wo, Cm) f32  [0] = cv1(maxpool(x)), [1] = cv2(cv1(x))
    _, Th, Wo, C1 = xp_ref.shape
    Cm = w1_ref.shape[1]
    n = Th * Wo

    xph = xp_ref[...]                                     # (4, Th, Wo, C1)
    x00, x01, x10, x11 = xph[0], xph[1], xph[2], xph[3]
    # 2x2/stride-2 maxpool == elementwise max of the four phase planes.
    pooled = jnp.maximum(jnp.maximum(x00, x01), jnp.maximum(x10, x11))

    # ---- single cv1 matmul over [4 phases | pooled | halo rows] ---------------
    xcat = jnp.concatenate(
        [xph.reshape(4 * n, C1),
         pooled.reshape(n, C1),
         xh_ref[...].reshape(2 * Wo, C1)], axis=0)        # ((5*Th+2)*Wo, C1) bf16
    y = _silu(jnp.dot(xcat, w1_ref[...],
                      preferred_element_type=jnp.float32) + b1_ref[...])   # f32

    # ---- branch A: cv1(maxpool2x2(x)) ------------------------------------------
    o_ref[0] = y[4 * n:5 * n].reshape(Th, Wo, Cm).astype(o_ref.dtype)

    # ---- branch B: cv2(cv1(x)) as ONE fused 9-tap matmul ------------------------
    yb = y[:4 * n].astype(jnp.bfloat16).reshape(4, Th, Wo, Cm)
    y00, y01, y10, y11 = yb[0], yb[1], yb[2], yb[3]

    # Halo rows went through cv1 above; zero them on the first row-tile so they
    # act as the conv's zero padding in y-space.
    halo_scale = (pl.program_id(1) > 0).astype(jnp.float32)
    yh = (y[5 * n:] * halo_scale).astype(jnp.bfloat16).reshape(2, Wo, Cm)
    if Th > 1:
        y10_up = jnp.concatenate([yh[0:1], y10[:-1]], axis=0)   # row ho -> ho-1
        y11_up = jnp.concatenate([yh[1:2], y11[:-1]], axis=0)
    else:
        y10_up, y11_up = yh[0:1], yh[1:2]

    def shl(p):  # S[:, j, :] = p[:, j-1, :], column 0 -> 0 (conv left padding)
        zcol = jnp.zeros((Th, 1, Cm), p.dtype)
        if Wo == 1:
            return zcol
        return jnp.concatenate([zcol, p[:, :-1, :]], axis=1)

    # Operand column-block t multiplies w2 rows [t*Cm, (t+1)*Cm); tap t = 3*dy+dx.
    op = jnp.concatenate(
        [shl(y11_up), y10_up, y11_up,     # dy = 0  (row 2*ho - 1)
         shl(y01),    y00,    y01,        # dy = 1  (row 2*ho)
         shl(y11),    y10,    y11],       # dy = 2  (row 2*ho + 1)
        axis=-1).reshape(n, 9 * Cm)
    zb = jnp.dot(op, w2_ref[...], preferred_element_type=jnp.float32) + b2_ref[...]
    o_ref[1] = _silu(zb).reshape(Th, Wo, Cm).astype(o_ref.dtype)


def m2c_forward(xp, w1, b1, w2, b2, row_tile, n_batch):
    # xp: (4*N, Ho, Wo, C1) bf16 phase tensor; returns (2*N, Ho, Wo, Cm) f32.
    _, Ho, Wo, C1 = xp.shape
    Cm = w1.shape[1]
    th = row_tile
    assert Ho % th == 0
    nt = Ho // th
    return pl.pallas_call(
        m2c_kernel,
        out_shape=jax.ShapeDtypeStruct((2 * n_batch, Ho, Wo, Cm), jnp.float32),
        grid=(n_batch, nt),
        in_specs=[
            # main phase block of this (batch, row-tile)
            pl.BlockSpec((4, th, Wo, C1), lambda b, i: (b, i, 0, 0)),
            # 1-row halo (phases 10, 11 at phase-row i*th - 1, clamped; zeroed in-kernel for i == 0)
            pl.BlockSpec((2, 1, Wo, C1),
                         lambda b, i: (2 * b + 1, jnp.maximum(i * th - 1, 0), 0, 0)),
            pl.BlockSpec((C1, Cm), lambda b, i: (0, 0)),
            pl.BlockSpec((1, Cm), lambda b, i: (0, 0)),
            pl.BlockSpec((9 * Cm, Cm), lambda b, i: (0, 0)),
            pl.BlockSpec((1, Cm), lambda b, i: (0, 0)),
        ],
        out_specs=pl.BlockSpec((2, th, Wo, Cm), lambda b, i: (b, i, 0, 0)),
        compiler_params=pltpu.CompilerParams(
            dimension_semantics=("parallel", "parallel"),
            vmem_limit_bytes=32 * 1024 * 1024),
    )(xp, xp, w1, b1, w2, b2)


def _pick_row_tile(Ho, Wo):
    # Target a few thousand output pixels per grid step; must divide Ho.
    th = min(Ho, max(1, 4096 // max(Wo, 1)))
    while Ho % th:
        th -= 1
    return th


def m2c_apply(x_nchw, w1, b1, w2, b2, *, row_tile=None):
    N, C1, H, W = x_nchw.shape
    # PyTorch's M2C itself requires even H/W (else the channel cat shapes disagree).
    assert H % 2 == 0 and W % 2 == 0, "M2C requires even spatial dims"
    Ho, Wo = H // 2, W // 2
    Cm = w1.shape[1]
    th = _pick_row_tile(Ho, Wo) if row_tile is None else row_tile

    # NCHW f32 -> bf16 phase tensor (4N, Ho, Wo, C1); phase = 2*row_par + col_par.
    # All stride-2 access handled here (plain XLA) so the kernel never strides
    # the minor dims.
    x = x_nchw.astype(jnp.bfloat16)
    xp = (x.reshape(N, C1, Ho, 2, Wo, 2)
            .transpose(0, 3, 5, 2, 4, 1)              # (N, py, px, Ho, Wo, C1)
            .reshape(N * 4, Ho, Wo, C1))

    out = m2c_forward(xp, w1, b1, w2, b2, th, N)      # (2N, Ho, Wo, Cm) f32
    # branch-split -> NCHW channel concat, matching torch.cat([...], dim=1)
    out = out.reshape(N, 2, Ho, Wo, Cm).transpose(0, 1, 4, 2, 3)
    return out.reshape(N, 2 * Cm, Ho, Wo)


# ----------------------- BN folding (eval mode) ----------------------------
def fold_conv_bn_1x1(w_conv, gamma, beta, mean, var, eps=1e-5):
    # w_conv: (c_out, c_in).  Returns (w bf16 (c_in,c_out), b f32 (1,c_out)).
    scale = gamma / jnp.sqrt(var + eps)
    w = (w_conv * scale[:, None]).T
    b = beta - mean * scale
    return w.astype(jnp.bfloat16), b[None, :].astype(jnp.float32)


def fold_conv_bn_3x3(w_conv, gamma, beta, mean, var, eps=1e-5):
    # w_conv: (c_out, c_in, 3, 3) -> single (9*c_in, c_out) matrix, rows tap-major
    # (tap t = dy*3 + dx, then c_in), matching the kernel's fused-tap operand.
    co, ci = w_conv.shape[0], w_conv.shape[1]
    scale = gamma / jnp.sqrt(var + eps)
    w = w_conv * scale[:, None, None, None]
    w = jnp.transpose(w, (2, 3, 1, 0)).reshape(9 * ci, co)
    b = beta - mean * scale
    return w.astype(jnp.bfloat16), b[None, :].astype(jnp.float32)


# ----------------------- pure-JAX reference --------------------------------
def ref_m2c(x_nchw, w1_conv, bn1, w2_conv, bn2, eps=1e-5):
    x = jnp.transpose(x_nchw, (0, 2, 3, 1))           # NHWC, f32

    def conv_bn_silu(inp, w, bn, stride, pad):
        g, bt, mu, var = bn
        y = jax.lax.conv_general_dilated(
            inp, jnp.transpose(w, (2, 3, 1, 0)),      # OIHW -> HWIO
            window_strides=(stride, stride),
            padding=[(pad, pad), (pad, pad)],
            dimension_numbers=("NHWC", "HWIO", "NHWC"),
            precision=jax.lax.Precision.HIGHEST)
        scale = g / jnp.sqrt(var + eps)
        y = y * scale + (bt - mu * scale)
        return y * jax.nn.sigmoid(y)

    pooled = jax.lax.reduce_window(x, -jnp.inf, jax.lax.max,
                                   (1, 2, 2, 1), (1, 2, 2, 1), "VALID")
    a = conv_bn_silu(pooled, w1_conv, bn1, 1, 0)
    y = conv_bn_silu(x, w1_conv, bn1, 1, 0)
    b = conv_bn_silu(y, w2_conv, bn2, 2, 1)
    out = jnp.concatenate([a, b], axis=-1)
    return jnp.transpose(out, (0, 3, 1, 2))


if __name__ == "__main__":
    key = jax.random.PRNGKey(0)
    N, C1, H, W = 2, 8, 16, 16          # input (PyTorch NCHW)
    C2 = 8                              # M2C(c1=8, c2=8, e=0.5)
    Cm = int(C2 * 0.5)                  # hidden width c = 4

    ks = jax.random.split(key, 11)
    x_nchw = jax.random.normal(ks[0], (N, C1, H, W), jnp.float32)

    # cv1 = Conv(c1, c, 1, 1)
    w1_conv = jax.random.normal(ks[1], (Cm, C1, 1, 1), jnp.float32) / np.sqrt(C1)
    g1 = 1.0 + 0.1 * jax.random.normal(ks[2], (Cm,), jnp.float32)
    bt1 = 0.1 * jax.random.normal(ks[3], (Cm,), jnp.float32)
    mu1 = 0.05 * jax.random.normal(ks[4], (Cm,), jnp.float32)
    var1 = 0.5 + 0.5 * jnp.abs(jax.random.normal(ks[5], (Cm,), jnp.float32))

    # cv2 = Conv(c, c, 3, 2)
    w2_conv = jax.random.normal(ks[6], (Cm, Cm, 3, 3), jnp.float32) / np.sqrt(Cm * 9)
    g2 = 1.0 + 0.1 * jax.random.normal(ks[7], (Cm,), jnp.float32)
    bt2 = 0.1 * jax.random.normal(ks[8], (Cm,), jnp.float32)
    mu2 = 0.05 * jax.random.normal(ks[9], (Cm,), jnp.float32)
    var2 = 0.5 + 0.5 * jnp.abs(jax.random.normal(ks[10], (Cm,), jnp.float32))

    w1, b1 = fold_conv_bn_1x1(w1_conv[:, :, 0, 0], g1, bt1, mu1, var1)
    w2, b2 = fold_conv_bn_3x3(w2_conv, g2, bt2, mu2, var2)

    # row_tile=4 -> 2 row-tiles per image (exercises the halo path) and 4
    # parallel grid steps even at this tiny size.
    out_nchw = m2c_apply(x_nchw, w1, b1, w2, b2, row_tile=4)
    jax.block_until_ready(out_nchw)
    assert out_nchw.shape == (N, 2 * Cm, H // 2, W // 2)

    ref = ref_m2c(x_nchw, w1_conv, (g1, bt1, mu1, var1),
                  w2_conv, (g2, bt2, mu2, var2))
    # bf16 MXU inputs vs. an f32 HIGHEST-precision reference -> slightly relaxed tol.
    np.testing.assert_allclose(np.asarray(out_nchw), np.asarray(ref),
                               rtol=2e-2, atol=3e-2)
    print("KERNEL_OK")
</pallas_src>

<mosaic_0001>
module attributes {stable_mosaic.version = 11 : i64} {
  func.func @m2c_kernel(%arg0: i32, %arg1: i32, %arg2: memref<4x4x8x8xbf16, #tpu.memory_space<vmem>>, %arg3: memref<2x1x8x8xbf16, #tpu.memory_space<vmem>>, %arg4: memref<8x4xbf16, #tpu.memory_space<vmem>>, %arg5: memref<1x4xf32, #tpu.memory_space<vmem>>, %arg6: memref<36x4xbf16, #tpu.memory_space<vmem>>, %arg7: memref<1x4xf32, #tpu.memory_space<vmem>>, %arg8: memref<2x4x8x4xf32, #tpu.memory_space<vmem>>) attributes {dimension_semantics = [#tpu.dimension_semantics<parallel>, #tpu.dimension_semantics<parallel>], iteration_bounds = array<i64: 2, 2>, scalar_prefetch = 0 : i64, scratch_operands = 0 : i64, tpu.core_type = #tpu.core_type<tc>, window_params = [{transform_indices = @transform_0, window_bounds = array<i64: 4, 4, 8, 8>}, {transform_indices = @transform_1, window_bounds = array<i64: 2, 1, 8, 8>}, {pipeline_mode = #tpu.pipeline_mode<synchronous>, transform_indices = @transform_2, window_bounds = array<i64: 8, 4>}, {pipeline_mode = #tpu.pipeline_mode<synchronous>, transform_indices = @transform_3, window_bounds = array<i64: 1, 4>}, {pipeline_mode = #tpu.pipeline_mode<synchronous>, transform_indices = @transform_4, window_bounds = array<i64: 36, 4>}, {pipeline_mode = #tpu.pipeline_mode<synchronous>, transform_indices = @transform_5, window_bounds = array<i64: 1, 4>}, {transform_indices = @transform_6, window_bounds = array<i64: 2, 4, 8, 4>}]} {
    %c0 = arith.constant 0 : index
    %c0_0 = arith.constant 0 : index
    %c0_1 = arith.constant 0 : index
    %c0_2 = arith.constant 0 : index
    %0 = vector.load %arg2[%c0, %c0_0, %c0_1, %c0_2] : memref<4x4x8x8xbf16, #tpu.memory_space<vmem>>, vector<4x4x8x8xbf16>
    %1 = vector.extract_strided_slice %0 {offsets = [0, 0, 0, 0], sizes = [1, 4, 8, 8], strides = [1, 1, 1, 1]} : vector<4x4x8x8xbf16> to vector<1x4x8x8xbf16>
    %2 = vector.shape_cast %1 : vector<1x4x8x8xbf16> to vector<4x8x8xbf16>
    %3 = vector.extract_strided_slice %0 {offsets = [1, 0, 0, 0], sizes = [1, 4, 8, 8], strides = [1, 1, 1, 1]} : vector<4x4x8x8xbf16> to vector<1x4x8x8xbf16>
    %4 = vector.shape_cast %3 : vector<1x4x8x8xbf16> to vector<4x8x8xbf16>
    %5 = vector.extract_strided_slice %0 {offsets = [2, 0, 0, 0], sizes = [1, 4, 8, 8], strides = [1, 1, 1, 1]} : vector<4x4x8x8xbf16> to vector<1x4x8x8xbf16>
    %6 = vector.shape_cast %5 : vector<1x4x8x8xbf16> to vector<4x8x8xbf16>
    %7 = vector.extract_strided_slice %0 {offsets = [3, 0, 0, 0], sizes = [1, 4, 8, 8], strides = [1, 1, 1, 1]} : vector<4x4x8x8xbf16> to vector<1x4x8x8xbf16>
    %8 = vector.shape_cast %7 : vector<1x4x8x8xbf16> to vector<4x8x8xbf16>
    %9 = arith.maximumf %2, %4 : vector<4x8x8xbf16>
    %10 = arith.maximumf %6, %8 : vector<4x8x8xbf16>
    %11 = arith.maximumf %9, %10 : vector<4x8x8xbf16>
    %12 = vector.shape_cast %0 : vector<4x4x8x8xbf16> to vector<128x8xbf16>
    %13 = vector.shape_cast %11 : vector<4x8x8xbf16> to vector<32x8xbf16>
    %c0_3 = arith.constant 0 : index
    %c0_4 = arith.constant 0 : index
    %c0_5 = arith.constant 0 : index
    %c0_6 = arith.constant 0 : index
    %14 = vector.load %arg3[%c0_3, %c0_4, %c0_5, %c0_6] : memref<2x1x8x8xbf16, #tpu.memory_space<vmem>>, vector<2x1x8x8xbf16>
    %15 = vector.shape_cast %14 : vector<2x1x8x8xbf16> to vector<16x8xbf16>
    %16 = tpu.concatenate %12, %13, %15 in 0 : vector<128x8xbf16>, vector<32x8xbf16>, vector<16x8xbf16> -> vector<176x8xbf16>
    %c0_7 = arith.constant 0 : index
    %c0_8 = arith.constant 0 : index
    %17 = vector.load %arg4[%c0_7, %c0_8] : memref<8x4xbf16, #tpu.memory_space<vmem>>, vector<8x4xbf16>
    %cst = arith.constant dense<0.000000e+00> : vector<176x4xf32>
    %18 = tpu.matmul %16, %17, %cst {dimension_numbers = #tpu.dot_dimension_numbers<[1], [0], [0], [1], [0, 0, 1, 1], [], []>} : vector<176x8xbf16>, vector<8x4xbf16>, vector<176x4xf32> -> vector<176x4xf32>
    %c0_9 = arith.constant 0 : index
    %c0_10 = arith.constant 0 : index
    %19 = vector.load %arg5[%c0_9, %c0_10] : memref<1x4xf32, #tpu.memory_space<vmem>>, vector<1x4xf32>
    %20 = vector.broadcast %19 : vector<1x4xf32> to vector<176x4xf32>
    %21 = arith.addf %18, %20 : vector<176x4xf32>
    %22 = arith.negf %21 : vector<176x4xf32>
    %23 = math.exp %22 : vector<176x4xf32>
    %cst_11 = arith.constant 1.000000e+00 : f32
    %24 = vector.broadcast %cst_11 : f32 to vector<176x4xf32>
    %25 = arith.addf %24, %23 : vector<176x4xf32>
    %26 = arith.divf %24, %25 : vector<176x4xf32>
    %27 = arith.mulf %21, %26 : vector<176x4xf32>
    %28 = vector.extract_strided_slice %27 {offsets = [128, 0], sizes = [32, 4], strides = [1, 1]} : vector<176x4xf32> to vector<32x4xf32>
    %29 = vector.shape_cast %28 : vector<32x4xf32> to vector<4x8x4xf32>
    %c0_12 = arith.constant 0 : index
    %c0_13 = arith.constant 0 : index
    %c0_14 = arith.constant 0 : index
    %c0_15 = arith.constant 0 : index
    %30 = vector.load %arg8[%c0_12, %c0_13, %c0_14, %c0_15] : memref<2x4x8x4xf32, #tpu.memory_space<vmem>>, vector<1x4x8x4xf32>
    %31 = vector.shape_cast %30 : vector<1x4x8x4xf32> to vector<4x8x4xf32>
    %32 = vector.shape_cast %29 : vector<4x8x4xf32> to vector<1x4x8x4xf32>
    tpu.vector_store %arg8[%c0_12, %c0_13, %c0_14, %c0_15], %32 {strides = array<i32>} : memref<2x4x8x4xf32, #tpu.memory_space<vmem>>, vector<1x4x8x4xf32>,
    %33 = vector.extract_strided_slice %27 {offsets = [0, 0], sizes = [128, 4], strides = [1, 1]} : vector<176x4xf32> to vector<128x4xf32>
    %34 = arith.truncf %33 : vector<128x4xf32> to vector<128x4xbf16>
    %35 = vector.shape_cast %34 : vector<128x4xbf16> to vector<4x4x8x4xbf16>
    %36 = vector.extract_strided_slice %35 {offsets = [0, 0, 0, 0], sizes = [1, 4, 8, 4], strides = [1, 1, 1, 1]} : vector<4x4x8x4xbf16> to vector<1x4x8x4xbf16>
    %37 = vector.shape_cast %36 : vector<1x4x8x4xbf16> to vector<4x8x4xbf16>
    %38 = vector.extract_strided_slice %35 {offsets = [1, 0, 0, 0], sizes = [1, 4, 8, 4], strides = [1, 1, 1, 1]} : vector<4x4x8x4xbf16> to vector<1x4x8x4xbf16>
    %39 = vector.shape_cast %38 : vector<1x4x8x4xbf16> to vector<4x8x4xbf16>
    %40 = vector.extract_strided_slice %35 {offsets = [2, 0, 0, 0], sizes = [1, 4, 8, 4], strides = [1, 1, 1, 1]} : vector<4x4x8x4xbf16> to vector<1x4x8x4xbf16>
    %41 = vector.shape_cast %40 : vector<1x4x8x4xbf16> to vector<4x8x4xbf16>
    %42 = vector.extract_strided_slice %35 {offsets = [3, 0, 0, 0], sizes = [1, 4, 8, 4], strides = [1, 1, 1, 1]} : vector<4x4x8x4xbf16> to vector<1x4x8x4xbf16>
    %43 = vector.shape_cast %42 : vector<1x4x8x4xbf16> to vector<4x8x4xbf16>
    %c0_i32 = arith.constant 0 : i32
    %44 = arith.cmpi sgt, %arg1, %c0_i32 : i32
    %45 = arith.extui %44 : i1 to i32
    %46 = arith.sitofp %45 : i32 to f32
    %47 = vector.extract_strided_slice %27 {offsets = [160, 0], sizes = [16, 4], strides = [1, 1]} : vector<176x4xf32> to vector<16x4xf32>
    %48 = vector.broadcast %46 : f32 to vector<16x4xf32>
    %49 = arith.mulf %47, %48 : vector<16x4xf32>
    %50 = arith.truncf %49 : vector<16x4xf32> to vector<16x4xbf16>
    %51 = vector.shape_cast %50 : vector<16x4xbf16> to vector<2x8x4xbf16>
    %52 = vector.extract_strided_slice %51 {offsets = [0, 0, 0], sizes = [1, 8, 4], strides = [1, 1, 1]} : vector<2x8x4xbf16> to vector<1x8x4xbf16>
    %53 = vector.extract_strided_slice %41 {offsets = [0, 0, 0], sizes = [3, 8, 4], strides = [1, 1, 1]} : vector<4x8x4xbf16> to vector<3x8x4xbf16>
    %54 = tpu.concatenate %52, %53 in 0 : vector<1x8x4xbf16>, vector<3x8x4xbf16> -> vector<4x8x4xbf16>
    %55 = vector.extract_strided_slice %51 {offsets = [1, 0, 0], sizes = [1, 8, 4], strides = [1, 1, 1]} : vector<2x8x4xbf16> to vector<1x8x4xbf16>
    %56 = vector.extract_strided_slice %43 {offsets = [0, 0, 0], sizes = [3, 8, 4], strides = [1, 1, 1]} : vector<4x8x4xbf16> to vector<3x8x4xbf16>
    %57 = tpu.concatenate %55, %56 in 0 : vector<1x8x4xbf16>, vector<3x8x4xbf16> -> vector<4x8x4xbf16>
    %cst_16 = arith.constant 0.000000e+00 : bf16
    %58 = vector.broadcast %cst_16 : bf16 to vector<4x1x4xbf16>
    %59 = vector.extract_strided_slice %57 {offsets = [0, 0, 0], sizes = [4, 7, 4], strides = [1, 1, 1]} : vector<4x8x4xbf16> to vector<4x7x4xbf16>
    %60 = tpu.concatenate %58, %59 in 1 : vector<4x1x4xbf16>, vector<4x7x4xbf16> -> vector<4x8x4xbf16>
    %cst_17 = arith.constant 0.000000e+00 : bf16
    %61 = vector.broadcast %cst_17 : bf16 to vector<4x1x4xbf16>
    %62 = vector.extract_strided_slice %39 {offsets = [0, 0, 0], sizes = [4, 7, 4], strides = [1, 1, 1]} : vector<4x8x4xbf16> to vector<4x7x4xbf16>
    %63 = tpu.concatenate %61, %62 in 1 : vector<4x1x4xbf16>, vector<4x7x4xbf16> -> vector<4x8x4xbf16>
    %cst_18 = arith.constant 0.000000e+00 : bf16
    %64 = vector.broadcast %cst_18 : bf16 to vector<4x1x4xbf16>
    %65 = vector.extract_strided_slice %43 {offsets = [0, 0, 0], sizes = [4, 7, 4], strides = [1, 1, 1]} : vector<4x8x4xbf16> to vector<4x7x4xbf16>
    %66 = tpu.concatenate %64, %65 in 1 : vector<4x1x4xbf16>, vector<4x7x4xbf16> -> vector<4x8x4xbf16>
    %67 = tpu.concatenate %60, %54, %57, %63, %37, %39, %66, %41, %43 in 2 : vector<4x8x4xbf16>, vector<4x8x4xbf16>, vector<4x8x4xbf16>, vector<4x8x4xbf16>, vector<4x8x4xbf16>, vector<4x8x4xbf16>, vector<4x8x4xbf16>, vector<4x8x4xbf16>, vector<4x8x4xbf16> -> vector<4x8x36xbf16>
    %68 = vector.shape_cast %67 : vector<4x8x36xbf16> to vector<32x36xbf16>
    %c0_19 = arith.constant 0 : index
    %c0_20 = arith.constant 0 : index
    %69 = vector.load %arg6[%c0_19, %c0_20] : memref<36x4xbf16, #tpu.memory_space<vmem>>, vector<36x4xbf16>
    %cst_21 = arith.constant dense<0.000000e+00> : vector<32x4xf32>
    %70 = tpu.matmul %68, %69, %cst_21 {dimension_numbers = #tpu.dot_dimension_numbers<[1], [0], [0], [1], [0, 0, 1, 1], [], []>} : vector<32x36xbf16>, vector<36x4xbf16>, vector<32x4xf32> -> vector<32x4xf32>
    %c0_22 = arith.constant 0 : index
    %c0_23 = arith.constant 0 : index
    %71 = vector.load %arg7[%c0_22, %c0_23] : memref<1x4xf32, #tpu.memory_space<vmem>>, vector<1x4xf32>
    %72 = vector.broadcast %71 : vector<1x4xf32> to vector<32x4xf32>
    %73 = arith.addf %70, %72 : vector<32x4xf32>
    %74 = arith.negf %73 : vector<32x4xf32>
    %75 = math.exp %74 : vector<32x4xf32>
    %cst_24 = arith.constant 1.000000e+00 : f32
    %76 = vector.broadcast %cst_24 : f32 to vector<32x4xf32>
    %77 = arith.addf %76, %75 : vector<32x4xf32>
    %78 = arith.divf %76, %77 : vector<32x4xf32>
    %79 = arith.mulf %73, %78 : vector<32x4xf32>
    %80 = vector.shape_cast %79 : vector<32x4xf32> to vector<4x8x4xf32>
    %c1 = arith.constant 1 : index
    %c0_25 = arith.constant 0 : index
    %c0_26 = arith.constant 0 : index
    %c0_27 = arith.constant 0 : index
    %81 = vector.load %arg8[%c1, %c0_25, %c0_26, %c0_27] : memref<2x4x8x4xf32, #tpu.memory_space<vmem>>, vector<1x4x8x4xf32>
    %82 = vector.shape_cast %81 : vector<1x4x8x4xf32> to vector<4x8x4xf32>
    %83 = vector.shape_cast %80 : vector<4x8x4xf32> to vector<1x4x8x4xf32>
    tpu.vector_store %arg8[%c1, %c0_25, %c0_26, %c0_27], %83 {strides = array<i32>} : memref<2x4x8x4xf32, #tpu.memory_space<vmem>>, vector<1x4x8x4xf32>,
    return
  }
  func.func @transform_0(%arg0: i32, %arg1: i32) -> (i32, i32, i32, i32) {
    %c0_i32 = arith.constant 0 : i32
    %c0_i32_0 = arith.constant 0 : i32
    %c0_i32_1 = arith.constant 0 : i32
    return %arg0, %arg1, %c0_i32, %c0_i32_0 : i32, i32, i32, i32
  }
  func.func @transform_1(%arg0: i32, %arg1: i32) -> (i32, i32, i32, i32) {
    %c2_i32 = arith.constant 2 : i32
    %0 = arith.muli %c2_i32, %arg0 : i32
    %c1_i32 = arith.constant 1 : i32
    %1 = arith.addi %0, %c1_i32 : i32
    %c4_i32 = arith.constant 4 : i32
    %2 = arith.muli %arg1, %c4_i32 : i32
    %c1_i32_0 = arith.constant 1 : i32
    %3 = arith.subi %2, %c1_i32_0 : i32
    %c0_i32 = arith.constant 0 : i32
    %4 = arith.maxsi %3, %c0_i32 : i32
    %c0_i32_1 = arith.constant 0 : i32
    %c0_i32_2 = arith.constant 0 : i32
    %c0_i32_3 = arith.constant 0 : i32
    return %1, %4, %c0_i32_1, %c0_i32_2 : i32, i32, i32, i32
  }
  func.func @transform_2(%arg0: i32, %arg1: i32) -> (i32, i32) {
    %c0_i32 = arith.constant 0 : i32
    %c0_i32_0 = arith.constant 0 : i32
    %c0_i32_1 = arith.constant 0 : i32
    return %c0_i32, %c0_i32_0 : i32, i32
  }
  func.func @transform_3(%arg0: i32, %arg1: i32) -> (i32, i32) {
    %c0_i32 = arith.constant 0 : i32
    %c0_i32_0 = arith.constant 0 : i32
    %c0_i32_1 = arith.constant 0 : i32
    return %c0_i32, %c0_i32_0 : i32, i32
  }
  func.func @transform_4(%arg0: i32, %arg1: i32) -> (i32, i32) {
    %c0_i32 = arith.constant 0 : i32
    %c0_i32_0 = arith.constant 0 : i32
    %c0_i32_1 = arith.constant 0 : i32
    return %c0_i32, %c0_i32_0 : i32, i32
  }
  func.func @transform_5(%arg0: i32, %arg1: i32) -> (i32, i32) {
    %c0_i32 = arith.constant 0 : i32
    %c0_i32_0 = arith.constant 0 : i32
    %c0_i32_1 = arith.constant 0 : i32
    return %c0_i32, %c0_i32_0 : i32, i32
  }
  func.func @transform_6(%arg0: i32, %arg1: i32) -> (i32, i32, i32, i32) {
    %c0_i32 = arith.constant 0 : i32
    %c0_i32_0 = arith.constant 0 : i32
    %c0_i32_1 = arith.constant 0 : i32
    return %arg0, %arg1, %c0_i32, %c0_i32_0 : i32, i32, i32, i32
  }
}

</mosaic_0001>

<llo_original>
// kernel: tpu_custom_call.1
$region0: #{tpu_custom_call.1}
  #allocation0 [shape = 'u32[]', space=smem, size = 0x4, offset = 0x4, fixed_abs, tag = 'smem constant byte address 0x4 - core index']
  #allocation1 [shape = 'u32[144,128]{1,0:T(1,128)}', space=vmem, size = 0x12000, scoped, tag = 'internal scratch']
  #allocation7 [shape = 's32[]', space=sflag, size = 0x4, offset = 0, fixed_abs, tag = 'sflag constant byte address 0x0 - dummy sync flag']
  %s0 = inlined_call_operand.hbm [shape: bf16[8,8,8,8], index: 0, kind: input, shape index: {}]
  %s1 = inlined_call_operand.hbm [shape: bf16[8,8,8,8], index: 1, kind: input, shape index: {}]
  %s2 = inlined_call_operand.vmem [shape: bf16[8,4], index: 2, kind: input, shape index: {}]
  %s3 = inlined_call_operand.vmem [shape: f32[1,4], index: 3, kind: input, shape index: {}]
  %s4 = inlined_call_operand.vmem [shape: bf16[36,4], index: 4, kind: input, shape index: {}]
  %s5 = inlined_call_operand.vmem [shape: f32[1,4], index: 5, kind: input, shape index: {}]
  %s6 = inlined_call_operand.vmem [shape: f32[4,8,8,4], index: 6, kind: output, shape index: {}]
  %s7 = sld [smem:[#allocation0]]
  $region99: #{tpu_custom_call.1} parent=0
    _
  %s9 = ssub.s32 1, %s7
  %s10 = scalar_select 0, %s9, %s7
  $region1: #{tpu_custom_call.1} parent=0
    #allocation2 [shape = 'u8[65536]{0}', space=vmem, size = 0x10000, scoped, tag = 'input window, operand 0']
    #allocation3 [shape = 's32[2]{0}', space=sflag, size = 0x8, scoped, tag = 'scoped memory for tpu_custom_call.1']
    #allocation4 [shape = 'u8[8192]{0}', space=vmem, size = 0x2000, scoped, tag = 'input window, operand 1']
    #allocation5 [shape = 's32[2]{0}', space=sflag, size = 0x8, scoped, tag = 'scoped memory for tpu_custom_call.1']
    #allocation6 [shape = 'u8[65536]{0}', space=vmem, size = 0x10000, scoped, tag = 'output window, operand 0']
    %11 = vsyncpa [#allocation3], 0
    %s12 = scalar_lea.sflag [#allocation3], 1
    %13 = vsyncpa %s12, 0
    %14 = vsyncpa [#allocation5], 0
    %s15 = scalar_lea.sflag [#allocation5], 1
    %16 = vsyncpa %s15, 0
    loop: start=0, step=1, limit=6
    $region2: #{tpu_custom_call.1} parent=1 // loop_pre_header
      _
    $region3: #{tpu_custom_call.1} parent=1 // loop_header
      %s18 = sphi 0, %s22
      %p19 = scmp.ge.s32.totalorder %s18, 6
      %s25 = sphi 0, %s37
      %s26 = sphi 0, %s33
      %s27 = sphi 0, %s25
      %s28 = sphi 0, %s26
      %s29 = sphi 0, %s27
      %s30 = sphi 0, %s28
      %s42 = sphi 0, %s44
      %s45 = sphi 0, %s42
      %s46 = sphi 0, %s45
      %s62 = sphi 0, %s46
      %s82 = sphi 0, %s84
      %s85 = sphi 0, %s82
      %s86 = sphi 0, %s85
      %s102 = sphi 0, %s86
      %s106 = sphi 0, %s106
      %s108 = sphi 0, %s106
      %s109 = sphi 0, %s108
      %s123 = sphi 0, %s109
      %s127 = sphi 0, %s127
      %s129 = sphi 0, %s127
      %s130 = sphi 0, %s129
      %s144 = sphi 0, %s130
      %s148 = sphi 0, %s148
      %s150 = sphi 0, %s148
      %s151 = sphi 0, %s150
      %s165 = sphi 0, %s151
      %s169 = sphi 0, %s169
      %s171 = sphi 0, %s169
      %s172 = sphi 0, %s171
      %s186 = sphi 0, %s172
      %s194 = sphi 0, %s196
      %s197 = sphi 0, %s194
      %s198 = sphi 0, %s197
      %s214 = sphi 0, %s198
    $region4: #{tpu_custom_call.1} parent=1 // loop_header_branch
      %21 = sbr.rel (%p19) target = $region8
    $region5: #{tpu_custom_call.1} parent=1 // loop_body
      %s23 = ssub.s32 %s18, 1
      %s24 = ssub.s32 %s18, 2
      %s31 = sadd.s32 1, %s26
      %p32 = scmp.ge.s32.totalorder %s31, 2
      %s33 = scalar_select %p32, 0, %s31
      %s34 = sadd.s32 1, %s25
      %s35 = scalar_select %p32, %s34, %s25
      %p36 = scmp.ge.s32.totalorder %s35, 2
      %s37 = scalar_select %p36, 0, %s35
      %s38 = ssub.s32 %s25, %s37
      %s39 = ssub.s32 %s26, %s33
      %s40 = sor.u32 %s38, %s39
      %p41 = scmp.eq.s32.totalorder %s40, 0
      %s43 = sadd.s32 %s42, 1
      %s44 = scalar_select %p41, %s42, %s43
      %p47 = pneg %p41
      %p48 = scmp.eq.s32.totalorder %s18, 3
      %p49 = por %p47, %p48
      %p50 = scmp.ne.s32.totalorder %s42, %s45
      %p51 = scmp.eq.s32.totalorder %s18, 0
      %p52 = por %p50, %p51
      %p53 = scmp.ne.s32.totalorder %s42, %s45
      %p54 = scmp.eq.s32.totalorder %s23, 3
      %p55 = por %p53, %p54
      %p56 = scmp.ne.s32.totalorder %s45, %s46
      %p57 = scmp.eq.s32.totalorder %s23, 0
      %p58 = por %p56, %p57
      %p59 = scmp.ne.s32.totalorder %s45, %s46
      %p60 = scmp.eq.s32.totalorder %s24, 3
      %p61 = por %p59, %p60
      %p63 = scmp.ne.s32.totalorder %s46, %s62
      %p64 = scmp.eq.s32.totalorder %s24, 0
      %p65 = por %p63, %p64
      %s66 = smul.u32 %s25, 2
      %s67 = sadd.s32 %s66, 1
      %s68 = smul.u32 %s26, 4
      %s69 = ssub.s32 %s68, 1
      %p70 = scmp.gt.s32.totalorder %s69, 0
      %s71 = scalar_select %p70, %s69, 0
      %s72 = smul.u32 %s37, 2
      %s73 = sadd.s32 %s72, 1
      %s74 = smul.u32 %s33, 4
      %s75 = ssub.s32 %s74, 1
      %p76 = scmp.gt.s32.totalorder %s75, 0
      %s77 = scalar_select %p76, %s75, 0
      %s78 = ssub.s32 %s67, %s73
      %s79 = ssub.s32 %s71, %s77
      %s80 = sor.u32 %s78, %s79
      %p81 = scmp.eq.s32.totalorder %s80, 0
      %s83 = sadd.s32 %s82, 1
      %s84 = scalar_select %p81, %s82, %s83
      %p87 = pneg %p81
      %p88 = scmp.eq.s32.totalorder %s18, 3
      %p89 = por %p87, %p88
      %p90 = scmp.ne.s32.totalorder %s82, %s85
      %p91 = scmp.eq.s32.totalorder %s18, 0
      %p92 = por %p90, %p91
      %p93 = scmp.ne.s32.totalorder %s82, %s85
      %p94 = scmp.eq.s32.totalorder %s23, 3
      %p95 = por %p93, %p94
      %p96 = scmp.ne.s32.totalorder %s85, %s86
      %p97 = scmp.eq.s32.totalorder %s23, 0
      %p98 = por %p96, %p97
      %p99 = scmp.ne.s32.totalorder %s85, %s86
      %p100 = scmp.eq.s32.totalorder %s24, 3
      %p101 = por %p99, %p100
      %p103 = scmp.ne.s32.totalorder %s86, %s102
      %p104 = scmp.eq.s32.totalorder %s24, 0
      %p105 = por %p103, %p104
      %s107 = sadd.s32 %s106, 1
      %p110 = scmp.eq.s32.totalorder %s18, 3
      %p111 = scmp.ne.s32.totalorder %s106, %s108
      %p112 = scmp.eq.s32.totalorder %s18, 0
      %p113 = por %p111, %p112
      %p114 = scmp.ne.s32.totalorder %s106, %s108
      %p115 = scmp.eq.s32.totalorder %s23, 3
      %p116 = por %p114, %p115
      %p117 = scmp.ne.s32.totalorder %s108, %s109
      %p118 = scmp.eq.s32.totalorder %s23, 0
      %p119 = por %p117, %p118
      %p120 = scmp.ne.s32.totalorder %s108, %s109
      %p121 = scmp.eq.s32.totalorder %s24, 3
      %p122 = por %p120, %p121
      %p124 = scmp.ne.s32.totalorder %s109, %s123
      %p125 = scmp.eq.s32.totalorder %s24, 0
      %p126 = por %p124, %p125
      %s128 = sadd.s32 %s127, 1
      %p131 = scmp.eq.s32.totalorder %s18, 3
      %p132 = scmp.ne.s32.totalorder %s127, %s129
      %p133 = scmp.eq.s32.totalorder %s18, 0
      %p134 = por %p132, %p133
      %p135 = scmp.ne.s32.totalorder %s127, %s129
      %p136 = scmp.eq.s32.totalorder %s23, 3
      %p137 = por %p135, %p136
      %p138 = scmp.ne.s32.totalorder %s129, %s130
      %p139 = scmp.eq.s32.totalorder %s23, 0
      %p140 = por %p138, %p139
      %p141 = scmp.ne.s32.totalorder %s129, %s130
      %p142 = scmp.eq.s32.totalorder %s24, 3
      %p143 = por %p141, %p142
      %p145 = scmp.ne.s32.totalorder %s130, %s144
      %p146 = scmp.eq.s32.totalorder %s24, 0
      %p147 = por %p145, %p146
      %s149 = sadd.s32 %s148, 1
      %p152 = scmp.eq.s32.totalorder %s18, 3
      %p153 = scmp.ne.s32.totalorder %s148, %s150
      %p154 = scmp.eq.s32.totalorder %s18, 0
      %p155 = por %p153, %p154
      %p156 = scmp.ne.s32.totalorder %s148, %s150
      %p157 = scmp.eq.s32.totalorder %s23, 3
      %p158 = por %p156, %p157
      %p159 = scmp.ne.s32.totalorder %s150, %s151
      %p160 = scmp.eq.s32.totalorder %s23, 0
      %p161 = por %p159, %p160
      %p162 = scmp.ne.s32.totalorder %s150, %s151
      %p163 = scmp.eq.s32.totalorder %s24, 3
      %p164 = por %p162, %p163
      %p166 = scmp.ne.s32.totalorder %s151, %s165
      %p167 = scmp.eq.s32.totalorder %s24, 0
      %p168 = por %p166, %p167
      %s170 = sadd.s32 %s169, 1
      %p173 = scmp.eq.s32.totalorder %s18, 3
      %p174 = scmp.ne.s32.totalorder %s169, %s171
      %p175 = scmp.eq.s32.totalorder %s18, 0
      %p176 = por %p174, %p175
      %p177 = scmp.ne.s32.totalorder %s169, %s171
      %p178 = scmp.eq.s32.totalorder %s23, 3
      %p179 = por %p177, %p178
      %p180 = scmp.ne.s32.totalorder %s171, %s172
      %p181 = scmp.eq.s32.totalorder %s23, 0
      %p182 = por %p180, %p181
      %p183 = scmp.ne.s32.totalorder %s171, %s172
      %p184 = scmp.eq.s32.totalorder %s24, 3
      %p185 = por %p183, %p184
      %p187 = scmp.ne.s32.totalorder %s172, %s186
      %p188 = scmp.eq.s32.totalorder %s24, 0
      %p189 = por %p187, %p188
      %s190 = ssub.s32 %s25, %s37
      %s191 = ssub.s32 %s26, %s33
      %s192 = sor.u32 %s190, %s191
      %p193 = scmp.eq.s32.totalorder %s192, 0
      %s195 = sadd.s32 %s194, 1
      %s196 = scalar_select %p193, %s194, %s195
      %p199 = pneg %p193
      %p200 = scmp.eq.s32.totalorder %s18, 3
      %p201 = por %p199, %p200
      %p202 = scmp.ne.s32.totalorder %s194, %s197
      %p203 = scmp.eq.s32.totalorder %s18, 0
      %p204 = por %p202, %p203
      %p205 = scmp.ne.s32.totalorder %s194, %s197
      %p206 = scmp.eq.s32.totalorder %s23, 3
      %p207 = por %p205, %p206
      %p208 = scmp.ne.s32.totalorder %s197, %s198
      %p209 = scmp.eq.s32.totalorder %s23, 0
      %p210 = por %p208, %p209
      %p211 = scmp.ne.s32.totalorder %s197, %s198
      %p212 = scmp.eq.s32.totalorder %s24, 3
      %p213 = por %p211, %p212
      %p215 = scmp.ne.s32.totalorder %s198, %s214
      %p216 = scmp.eq.s32.totalorder %s24, 0
      %p217 = por %p215, %p216
      %p218 = scmp.le.s32.totalorder 1, %s18
      %p219 = scmp.lt.s32.totalorder %s18, 5
      %p220 = pnand %p218, %p219
      %p221 = pneg %p220
      // Predicated region
      $region9: #{tpu_custom_call.1} parent=5 // pred_check
        _
      $region10: #{tpu_custom_call.1} parent=5 // pred_check_branch
        %223 = sbr.rel (%p220) target = $region12
      $region11: #{tpu_custom_call.1} parent=5 // pred_region
        %s224 = ssub.s32 %s18, 1
        // Predicated region
        $region13: #{tpu_custom_call.1} parent=11 // pred_check
          %p225 = pneg %p119
        $region14: #{tpu_custom_call.1} parent=11 // pred_check_branch
          %227 = sbr.rel (%p225) target = $region16
        $region15: #{tpu_custom_call.1} parent=11 // pred_region
          _
        $region16: #{tpu_custom_call.1} parent=11 // pred_fallthru
          _
        // Predicated region
        $region17: #{tpu_custom_call.1} parent=11 // pred_check
          %p228 = pneg %p140
        $region18: #{tpu_custom_call.1} parent=11 // pred_check_branch
          %230 = sbr.rel (%p228) target = $region20
        $region19: #{tpu_custom_call.1} parent=11 // pred_region
          _
        $region20: #{tpu_custom_call.1} parent=11 // pred_fallthru
          _
        // Predicated region
        $region21: #{tpu_custom_call.1} parent=11 // pred_check
          %p231 = pneg %p161
        $region22: #{tpu_custom_call.1} parent=11 // pred_check_branch
          %233 = sbr.rel (%p231) target = $region24
        $region23: #{tpu_custom_call.1} parent=11 // pred_region
          _
        $region24: #{tpu_custom_call.1} parent=11 // pred_fallthru
          _
        // Predicated region
        $region25: #{tpu_custom_call.1} parent=11 // pred_check
          %p234 = pneg %p182
        $region26: #{tpu_custom_call.1} parent=11 // pred_check_branch
          %236 = sbr.rel (%p234) target = $region28
        $region27: #{tpu_custom_call.1} parent=11 // pred_region
          _
        $region28: #{tpu_custom_call.1} parent=11 // pred_fallthru
          _
      $region12: #{tpu_custom_call.1} parent=5 // pred_fallthru
        _
      %p237 = scmp.lt.s32.totalorder %s18, 4
      // Predicated region
      $region29: #{tpu_custom_call.1} parent=5 // pred_check
        %p238 = pneg %p237
      $region30: #{tpu_custom_call.1} parent=5 // pred_check_branch
        %240 = sbr.rel (%p238) target = $region32
      $region31: #{tpu_custom_call.1} parent=5 // pred_region
        // Predicated region
        $region33: #{tpu_custom_call.1} parent=31 // pred_check
          %p241 = pneg %p52
        $region34: #{tpu_custom_call.1} parent=31 // pred_check_branch
          %243 = sbr.rel (%p241) target = $region36
        $region35: #{tpu_custom_call.1} parent=31 // pred_region
          #allocation8 [shape = 'u32[6]{0}', space=smem, size = 0x18, scoped, tag = 'DMA stride descriptor']
          %s244 = sand.u32 %s42, 1
          %s245 = scalar_lea.sflag [#allocation3], %s244
          %s246 = sand.u32 %s42, 1
          %s247 = smul.addr %s246, 64
          %s248 = scalar_lea.vmem [#allocation2], %s247
          %s249 = smul.u32 4, %s25
          %s250 = smul.u32 4, %s26
          %s252 = ssub.s32 1024, 1024
          %253 = vsyncadd %s245, %s252
          %s254 = smul.addr %s249, 8
          %s255 = sadd.s32 %s250, %s254
          %s256 = smul.addr %s255, 64
          %s257 = scalar_lea.hbm %s0, %s256
          %s259 = sshll.u32 1, 14
          %s260 = sxor.u32 4294967295, %s259
          %s262 = sld [smem:[#allocation0]]
          %s263 = sadd.s32 2, %s262
          %s265 = sshll.u32 7, 26
          %s266 = sxor.u32 4294967295, %s265
          %s267 = sand.u32 0, %s266
          %s268 = sshll.u32 %s263, 26
          %s269 = sor.u32 %s267, %s268
          %s270 = sshll.u32 %s248, 4
          %s271 = int_to_ptr.vmem [resolvable:$true] %s270
          %277 = sst [smem:[#allocation8]] 512
          %s278 = scalar_lea.smem [#allocation8], 1
          %279 = sst [smem:[%s278]] 256
          %s280 = scalar_lea.smem [#allocation8], 2
          %281 = sst [smem:[%s280]] 4
          %s282 = scalar_lea.smem [#allocation8], 3
          %283 = sst [smem:[%s282]] 64
          %s284 = scalar_lea.smem [#allocation8], 4
          %285 = sst [smem:[%s284]] 64
          %s286 = scalar_lea.smem [#allocation8], 5
          %287 = sst [smem:[%s286]] 4
          %289 = dma.general %s257, 1024, %s271, %s245, [#allocation7], [#allocation8], %s269, 0
        $region36: #{tpu_custom_call.1} parent=31 // pred_fallthru
          _
        // Predicated region
        $region37: #{tpu_custom_call.1} parent=31 // pred_check
          %p290 = pneg %p92
        $region38: #{tpu_custom_call.1} parent=31 // pred_check_branch
          %292 = sbr.rel (%p290) target = $region40
        $region39: #{tpu_custom_call.1} parent=31 // pred_region
          %s293 = sand.u32 %s82, 1
          %s294 = scalar_lea.sflag [#allocation5], %s293
          %s295 = sand.u32 %s82, 1
          %s296 = smul.addr %s295, 8
          %s297 = scalar_lea.vmem [#allocation4], %s296
          %s298 = smul.u32 %s25, 2
          %s299 = sadd.s32 %s298, 1
          %s300 = smul.u32 %s26, 4
          %s301 = ssub.s32 %s300, 1
          %p302 = scmp.gt.s32.totalorder %s301, 0
          %s303 = scalar_select %p302, %s301, 0
          %s304 = smul.u32 2, %s299
          %s306 = ssub.s32 128, 128
          %307 = vsyncadd %s294, %s306
          %s308 = smul.addr %s304, 8
          %s309 = sadd.s32 %s303, %s308
          %s310 = smul.addr %s309, 64
          %s311 = scalar_lea.hbm %s1, %s310
          %s312 = sshll.u32 %s297, 4
          %s313 = int_to_ptr.vmem [resolvable:$true] %s312
          %318 = dma.hbm_to_vmem [thread:$0]  %s311, 128, %s313, %s294, 512, 64, 4
        $region40: #{tpu_custom_call.1} parent=31 // pred_fallthru
          _
      $region32: #{tpu_custom_call.1} parent=5 // pred_fallthru
        _
      %p319 = scmp.le.s32.totalorder 1, %s18
      %p320 = scmp.lt.s32.totalorder %s18, 5
      %p321 = pnand %p319, %p320
      %p322 = pneg %p321
      // Predicated region
      $region41: #{tpu_custom_call.1} parent=5 // pred_check
        _
      $region42: #{tpu_custom_call.1} parent=5 // pred_check_branch
        %324 = sbr.rel (%p321) target = $region44
      $region43: #{tpu_custom_call.1} parent=5 // pred_region
        %s325 = ssub.s32 %s18, 1
        %s326 = sand.u32 %s45, 1
        %s327 = scalar_lea.sflag [#allocation3], %s326
        %s328 = sand.u32 %s45, 1
        %s329 = smul.addr %s328, 64
        %s330 = scalar_lea.vmem [#allocation2], %s329
        // Predicated region
        $region45: #{tpu_custom_call.1} parent=43 // pred_check
          %p331 = pneg %p58
        $region46: #{tpu_custom_call.1} parent=43 // pred_check_branch
          %333 = sbr.rel (%p331) target = $region48
        $region47: #{tpu_custom_call.1} parent=43 // pred_region
          %334 = dma.done %s327, 1024
        $region48: #{tpu_custom_call.1} parent=43 // pred_fallthru
          _
        %s335 = sand.u32 %s85, 1
        %s336 = scalar_lea.sflag [#allocation5], %s335
        %s337 = sand.u32 %s85, 1
        %s338 = smul.addr %s337, 8
        %s339 = scalar_lea.vmem [#allocation4], %s338
        // Predicated region
        $region49: #{tpu_custom_call.1} parent=43 // pred_check
          %p340 = pneg %p98
        $region50: #{tpu_custom_call.1} parent=43 // pred_check_branch
          %342 = sbr.rel (%p340) target = $region52
        $region51: #{tpu_custom_call.1} parent=43 // pred_region
          %343 = dma.done %s336, 128
        $region52: #{tpu_custom_call.1} parent=43 // pred_fallthru
          _
        %s344 = sand.u32 %s45, 1
        %s345 = scalar_lea.sflag [#allocation3], %s344
        %s346 = sand.u32 %s45, 1
        %s347 = smul.addr %s346, 64
        %s348 = scalar_lea.vmem [#allocation2], %s347
        %p349 = pneg %p58
        %p350 = pneg %p55
        %s351 = sand.u32 %s85, 1
        %s352 = scalar_lea.sflag [#allocation5], %s351
        %s353 = sand.u32 %s85, 1
        %s354 = smul.addr %s353, 8
        %s355 = scalar_lea.vmem [#allocation4], %s354
        %p356 = pneg %p98
        %p357 = pneg %p95
        %p358 = pneg %p119
        %p359 = pneg %p116
        %p360 = pneg %p140
        %p361 = pneg %p137
        %p362 = pneg %p161
        %p363 = pneg %p158
        %p364 = pneg %p182
        %p365 = pneg %p179
        %p366 = pneg %p210
        %p367 = pneg %p207
        %s368 = sand.u32 %s197, 1
        %s369 = sand.u32 %s197, 1
        %s370 = smul.addr %s369, 64
        %s371 = scalar_lea.vmem [#allocation6], %s370
        %s372 = smul.u32 4, %s27
        %s373 = smul.u32 4, %s28
        %s374 = smul.u32 %s27, 2
        %s375 = sadd.s32 %s374, 1
        %s376 = smul.u32 %s28, 4
        %s377 = ssub.s32 %s376, 1
        %p378 = scmp.gt.s32.totalorder %s377, 0
        %s379 = scalar_select %p378, %s377, 0
        %s380 = smul.u32 2, %s375
        %s381 = smul.u32 2, %s27
        %s382 = smul.u32 4, %s28
        %v384 = vld [vmem:[%s330] sm:$0xf]
        %v385 = vld [vmem:[%s330 + $0x4] sm:$0xf]
        %v386 = vld [vmem:[%s330 + $0x8] sm:$0xf]
        %v387 = vld [vmem:[%s330 + $0xc] sm:$0xf]
        %v388 = vld [vmem:[%s330 + $0x10] sm:$0xf]
        %v389 = vld [vmem:[%s330 + $0x14] sm:$0xf]
        %v390 = vld [vmem:[%s330 + $0x18] sm:$0xf]
        %v391 = vld [vmem:[%s330 + $0x1c] sm:$0xf]
        %v392 = vld [vmem:[%s330 + $0x20] sm:$0xf]
        %v393 = vld [vmem:[%s330 + $0x24] sm:$0xf]
        %v394 = vld [vmem:[%s330 + $0x28] sm:$0xf]
        %v395 = vld [vmem:[%s330 + $0x2c] sm:$0xf]
        %v396 = vld [vmem:[%s330 + $0x30] sm:$0xf]
        %v397 = vld [vmem:[%s330 + $0x34] sm:$0xf]
        %v398 = vld [vmem:[%s330 + $0x38] sm:$0xf]
        %v399 = vld [vmem:[%s330 + $0x3c] sm:$0xf]
        %v400 = vmax.bf16 %v384, %v388
        %v401 = vmax.bf16 %v385, %v389
        %v402 = vmax.bf16 %v386, %v390
        %v403 = vmax.bf16 %v387, %v391
        %v404 = vmax.bf16 %v392, %v396
        %v405 = vmax.bf16 %v393, %v397
        %v406 = vmax.bf16 %v394, %v398
        %v407 = vmax.bf16 %v395, %v399
        %v408 = vmax.bf16 %v400, %v404
        %v409 = vmax.bf16 %v401, %v405
        %v410 = vmax.bf16 %v402, %v406
        %v411 = vmax.bf16 %v403, %v407
        %v412 = vld [vmem:[%s339] sm:$0xf]
        %v413 = vld [vmem:[%s339 + $0x4] sm:$0xf]
        %v430 = vunpack.c.l.b16 %v384
        %v431 = vunpack.c.l.b16 %v385
        %v432 = vunpack.c.l.b16 %v386
        %v433 = vunpack.c.l.b16 %v387
        %v434 = vunpack.c.l.b16 %v388
        %v435 = vunpack.c.l.b16 %v389
        %v436 = vunpack.c.l.b16 %v390
        %v437 = vunpack.c.l.b16 %v391
        %v438 = vunpack.c.l.b16 %v392
        %v439 = vunpack.c.l.b16 %v393
        %v440 = vunpack.c.l.b16 %v394
        %v441 = vunpack.c.l.b16 %v395
        %v442 = vunpack.c.l.b16 %v396
        %v443 = vunpack.c.l.b16 %v397
        %v444 = vunpack.c.l.b16 %v398
        %v445 = vunpack.c.l.b16 %v399
        %v446 = vpack.c.b16 %v431, %v430
        %v447 = vpack.c.b16 %v433, %v432
        %v448 = vpack.c.b16 %v435, %v434
        %v449 = vpack.c.b16 %v437, %v436
        %v450 = vpack.c.b16 %v439, %v438
        %v451 = vpack.c.b16 %v441, %v440
        %v452 = vpack.c.b16 %v443, %v442
        %v453 = vpack.c.b16 %v445, %v444
        %v458 = vunpack.c.l.b16 %v408
        %v459 = vunpack.c.l.b16 %v409
        %v460 = vunpack.c.l.b16 %v410
        %v461 = vunpack.c.l.b16 %v411
        %v462 = vpack.c.b16 %v459, %v458
        %v463 = vpack.c.b16 %v461, %v460
        %v466 = vunpack.c.l.b16 %v412
        %v467 = vunpack.c.l.b16 %v413
        %v468 = vpack.c.b16 %v467, %v466
        %v469 = vld [vmem:[%s2] sm:$0xf]
        %v470 = vld [vmem:[%s3] sm:$0x1]
        %v472 = vlaneseq
        %v473 = vshrl.u32 %v472, 7
        %v474 = vsub.s32 0, %v473
        %v475 = vrot.slane %v470, %v474
        %vm477 = vcmask 64512
        %v479 = vsel %vm477, %v446, 0
        %v482 = vsel %vm477, %v447, 0
        %v485 = vsel %vm477, %v448, 0
        %v488 = vsel %vm477, %v449, 0
        %v491 = vsel %vm477, %v450, 0
        %v494 = vsel %vm477, %v451, 0
        %v497 = vsel %vm477, %v452, 0
        %v500 = vsel %vm477, %v453, 0
        %v503 = vsel %vm477, %v462, 0
        %v506 = vsel %vm477, %v463, 0
        %v509 = vsel %vm477, %v468, 0
        %vm511 = vcmask 1043456
        %v513 = vsel %vm511, %v469, 0
        %515 = vmatprep.subr.bf16.mxu0 0
        %516 = vmatpush1.bf16.msra.mxu0 %v513
        %517 = vmatprep.subr.bf16.mxu0 0
        %518 = vmatpush1.bf16.msra.mxu0 0
        %519 = vmatprep.subr.bf16.mxu0 0
        %520 = vmatpush1.bf16.msra.mxu0 0
        %521 = vmatprep.subr.bf16.mxu0 0
        %522 = vmatpush1.bf16.msra.mxu0 0
        %523 = vmatprep.subr.bf16.mxu0 0
        %524 = vmatpush1.bf16.msra.mxu0 0
        %525 = vmatprep.subr.bf16.mxu0 0
        %526 = vmatpush1.bf16.msra.mxu0 0
        %527 = vmatprep.subr.bf16.mxu0 0
        %528 = vmatpush1.bf16.msra.mxu0 0
        %529 = vmatprep.subr.bf16.mxu0 0
        %530 = vmatpush1.bf16.msra.mxu0 0
        %531 = vmatprep.subr.bf16.mxu0 0
        %532 = vmatpush1.bf16.msra.mxu0 0
        %533 = vmatprep.subr.bf16.mxu0 0
        %534 = vmatpush1.bf16.msra.mxu0 0
        %535 = vmatprep.subr.bf16.mxu0 0
        %536 = vmatpush1.bf16.msra.mxu0 0
        %537 = vmatprep.subr.bf16.mxu0 0
        %538 = vmatpush1.bf16.msra.mxu0 0
        %539 = vmatprep.subr.bf16.mxu0 0
        %540 = vmatpush1.bf16.msra.mxu0 0
        %541 = vmatprep.subr.bf16.mxu0 0
        %542 = vmatpush1.bf16.msra.mxu0 0
        %543 = vmatprep.subr.bf16.mxu0 0
        %544 = vmatpush1.bf16.msra.mxu0 0
        %545 = vmatprep.subr.bf16.mxu0 0
        %546 = vmatpush1.bf16.msra.mxu0 0
        %547 = vmatprep.mubr.bf16.mxu0 0
        %548 = vmatmul.mubr.bf16.gmra.mrb[0].mxu0 %v479
        %v549 = vpop.f32.mrb[0].mxu0
        %v550 = vadd.f32 %v475, %v549
        %v551 = vpop.f32.mrb[0].mxu0
        %v552 = vpop.f32.mrb[0].mxu0
        %v553 = vadd.f32 %v475, %v552
        %v554 = vpop.f32.mrb[0].mxu0
        %555 = vmatprep.mubr.bf16.mxu0 0
        %556 = vmatmul.mubr.bf16.gmra.mrb[0].mxu0 %v482
        %v557 = vpop.f32.mrb[0].mxu0
        %v558 = vadd.f32 %v475, %v557
        %v559 = vpop.f32.mrb[0].mxu0
        %v560 = vpop.f32.mrb[0].mxu0
        %v561 = vadd.f32 %v475, %v560
        %v562 = vpop.f32.mrb[0].mxu0
        %563 = vmatprep.mubr.bf16.mxu0 0
        %564 = vmatmul.mubr.bf16.gmra.mrb[0].mxu0 %v485
        %v565 = vpop.f32.mrb[0].mxu0
        %v566 = vadd.f32 %v475, %v565
        %v567 = vpop.f32.mrb[0].mxu0
        %v568 = vpop.f32.mrb[0].mxu0
        %v569 = vadd.f32 %v475, %v568
        %v570 = vpop.f32.mrb[0].mxu0
        %571 = vmatprep.mubr.bf16.mxu0 0
        %572 = vmatmul.mubr.bf16.gmra.mrb[0].mxu0 %v488
        %v573 = vpop.f32.mrb[0].mxu0
        %v574 = vadd.f32 %v475, %v573
        %v575 = vpop.f32.mrb[0].mxu0
        %v576 = vpop.f32.mrb[0].mxu0
        %v577 = vadd.f32 %v475, %v576
        %v578 = vpop.f32.mrb[0].mxu0
        %579 = vmatprep.mubr.bf16.mxu0 0
        %580 = vmatmul.mubr.bf16.gmra.mrb[0].mxu0 %v491
        %v581 = vpop.f32.mrb[0].mxu0
        %v582 = vadd.f32 %v475, %v581
        %v583 = vpop.f32.mrb[0].mxu0
        %v584 = vpop.f32.mrb[0].mxu0
        %v585 = vadd.f32 %v475, %v584
        %v586 = vpop.f32.mrb[0].mxu0
        %587 = vmatprep.mubr.bf16.mxu0 0
        %588 = vmatmul.mubr.bf16.gmra.mrb[0].mxu0 %v494
        %v589 = vpop.f32.mrb[0].mxu0
        %v590 = vadd.f32 %v475, %v589
        %v591 = vpop.f32.mrb[0].mxu0
        %v592 = vpop.f32.mrb[0].mxu0
        %v593 = vadd.f32 %v475, %v592
        %v594 = vpop.f32.mrb[0].mxu0
        %595 = vmatprep.mubr.bf16.mxu0 0
        %596 = vmatmul.mubr.bf16.gmra.mrb[0].mxu0 %v497
        %v597 = vpop.f32.mrb[0].mxu0
        %v598 = vadd.f32 %v475, %v597
        %v599 = vpop.f32.mrb[0].mxu0
        %v600 = vpop.f32.mrb[0].mxu0
        %v601 = vadd.f32 %v475, %v600
        %v602 = vpop.f32.mrb[0].mxu0
        %603 = vmatprep.mubr.bf16.mxu0 0
        %604 = vmatmul.mubr.bf16.gmra.mrb[0].mxu0 %v500
        %v605 = vpop.f32.mrb[0].mxu0
        %v606 = vadd.f32 %v475, %v605
        %v607 = vpop.f32.mrb[0].mxu0
        %v608 = vpop.f32.mrb[0].mxu0
        %v609 = vadd.f32 %v475, %v608
        %v610 = vpop.f32.mrb[0].mxu0
        %611 = vmatprep.mubr.bf16.mxu0 0
        %612 = vmatmul.mubr.bf16.gmra.mrb[0].mxu0 %v503
        %v613 = vpop.f32.mrb[0].mxu0
        %v614 = vadd.f32 %v475, %v613
        %v615 = vpop.f32.mrb[0].mxu0
        %v616 = vpop.f32.mrb[0].mxu0
        %v617 = vadd.f32 %v475, %v616
        %v618 = vpop.f32.mrb[0].mxu0
        %619 = vmatprep.mubr.bf16.mxu0 0
        %620 = vmatmul.mubr.bf16.gmra.mrb[0].mxu0 %v506
        %v621 = vpop.f32.mrb[0].mxu0
        %v622 = vadd.f32 %v475, %v621
        %v623 = vpop.f32.mrb[0].mxu0
        %v624 = vpop.f32.mrb[0].mxu0
        %v625 = vadd.f32 %v475, %v624
        %v626 = vpop.f32.mrb[0].mxu0
        %627 = vmatprep.mubr.bf16.mxu0 0
        %628 = vmatmul.mubr.bf16.gmra.mrb[0].mxu0 %v509
        %v629 = vpop.f32.mrb[0].mxu0
        %v630 = vadd.f32 %v475, %v629
        %v631 = vpop.f32.mrb[0].mxu0
        %v632 = vpop.f32.mrb[0].mxu0
        %v633 = vadd.f32 %v475, %v632
        %v634 = vpop.f32.mrb[0].mxu0
        %635 = vdwg.mxu0
        %v636 = vxor.u32 %v550, 2147483648
        %v637 = vxor.u32 %v553, 2147483648
        %v638 = vxor.u32 %v558, 2147483648
        %v639 = vxor.u32 %v561, 2147483648
        %v640 = vxor.u32 %v566, 2147483648
        %v641 = vxor.u32 %v569, 2147483648
        %v642 = vxor.u32 %v574, 2147483648
        %v643 = vxor.u32 %v577, 2147483648
        %v644 = vxor.u32 %v582, 2147483648
        %v645 = vxor.u32 %v585, 2147483648
        %v646 = vxor.u32 %v590, 2147483648
        %v647 = vxor.u32 %v593, 2147483648
        %v648 = vxor.u32 %v598, 2147483648
        %v649 = vxor.u32 %v601, 2147483648
        %v650 = vxor.u32 %v606, 2147483648
        %v651 = vxor.u32 %v609, 2147483648
        %v652 = vxor.u32 %v614, 2147483648
        %v653 = vxor.u32 %v617, 2147483648
        %v654 = vxor.u32 %v622, 2147483648
        %v655 = vxor.u32 %v625, 2147483648
        %v656 = vxor.u32 %v630, 2147483648
        %v657 = vxor.u32 %v633, 2147483648
        %v658 = vmul.f32 %v636, 1.442695
        %v659 = vpow.pop %v658
        %v660 = vmul.f32 %v637, 1.442695
        %v661 = vpow.pop %v660
        %v662 = vmul.f32 %v638, 1.442695
        %v663 = vpow.pop %v662
        %v664 = vmul.f32 %v639, 1.442695
        %v665 = vpow.pop %v664
        %v666 = vmul.f32 %v640, 1.442695
        %v667 = vpow.pop %v666
        %v668 = vmul.f32 %v641, 1.442695
        %v669 = vpow.pop %v668
        %v670 = vmul.f32 %v642, 1.442695
        %v671 = vpow.pop %v670
        %v672 = vmul.f32 %v643, 1.442695
        %v673 = vpow.pop %v672
        %v674 = vmul.f32 %v644, 1.442695
        %v675 = vpow.pop %v674
        %v676 = vmul.f32 %v645, 1.442695
        %v677 = vpow.pop %v676
        %v678 = vmul.f32 %v646, 1.442695
        %v679 = vpow.pop %v678
        %v680 = vmul.f32 %v647, 1.442695
        %v681 = vpow.pop %v680
        %v682 = vmul.f32 %v648, 1.442695
        %v683 = vpow.pop %v682
        %v684 = vmul.f32 %v649, 1.442695
        %v685 = vpow.pop %v684
        %v686 = vmul.f32 %v650, 1.442695
        %v687 = vpow.pop %v686
        %v688 = vmul.f32 %v651, 1.442695
        %v689 = vpow.pop %v688
        %v690 = vmul.f32 %v652, 1.442695
        %v691 = vpow.pop %v690
        %v692 = vmul.f32 %v653, 1.442695
        %v693 = vpow.pop %v692
        %v694 = vmul.f32 %v654, 1.442695
        %v695 = vpow.pop %v694
        %v696 = vmul.f32 %v655, 1.442695
        %v697 = vpow.pop %v696
        %v698 = vmul.f32 %v656, 1.442695
        %v699 = vpow.pop %v698
        %v700 = vmul.f32 %v657, 1.442695
        %v701 = vpow.pop %v700
        %v702 = vadd.f32 %v659, 1.0
        %v703 = vadd.f32 %v661, 1.0
        %v704 = vadd.f32 %v663, 1.0
        %v705 = vadd.f32 %v665, 1.0
        %v706 = vadd.f32 %v667, 1.0
        %v707 = vadd.f32 %v669, 1.0
        %v708 = vadd.f32 %v671, 1.0
        %v709 = vadd.f32 %v673, 1.0
        %v710 = vadd.f32 %v675, 1.0
        %v711 = vadd.f32 %v677, 1.0
        %v712 = vadd.f32 %v679, 1.0
        %v713 = vadd.f32 %v681, 1.0
        %v714 = vadd.f32 %v683, 1.0
        %v715 = vadd.f32 %v685, 1.0
        %v716 = vadd.f32 %v687, 1.0
        %v717 = vadd.f32 %v689, 1.0
        %v718 = vadd.f32 %v691, 1.0
        %v719 = vadd.f32 %v693, 1.0
        %v720 = vadd.f32 %v695, 1.0
        %v721 = vadd.f32 %v697, 1.0
        %v722 = vadd.f32 %v699, 1.0
        %v723 = vadd.f32 %v701, 1.0
        %v724 = vrcp.pop %v702
        %v725 = vmul.f32 1.0, %v724
        %v726 = vrcp.pop %v703
        %v727 = vmul.f32 1.0, %v726
        %v728 = vrcp.pop %v704
        %v729 = vmul.f32 1.0, %v728
        %v730 = vrcp.pop %v705
        %v731 = vmul.f32 1.0, %v730
        %v732 = vrcp.pop %v706
        %v733 = vmul.f32 1.0, %v732
        %v734 = vrcp.pop %v707
        %v735 = vmul.f32 1.0, %v734
        %v736 = vrcp.pop %v708
        %v737 = vmul.f32 1.0, %v736
        %v738 = vrcp.pop %v709
        %v739 = vmul.f32 1.0, %v738
        %v740 = vrcp.pop %v710
        %v741 = vmul.f32 1.0, %v740
        %v742 = vrcp.pop %v711
        %v743 = vmul.f32 1.0, %v742
        %v744 = vrcp.pop %v712
        %v745 = vmul.f32 1.0, %v744
        %v746 = vrcp.pop %v713
        %v747 = vmul.f32 1.0, %v746
        %v748 = vrcp.pop %v714
        %v749 = vmul.f32 1.0, %v748
        %v750 = vrcp.pop %v715
        %v751 = vmul.f32 1.0, %v750
        %v752 = vrcp.pop %v716
        %v753 = vmul.f32 1.0, %v752
        %v754 = vrcp.pop %v717
        %v755 = vmul.f32 1.0, %v754
        %v756 = vrcp.pop %v718
        %v757 = vmul.f32 1.0, %v756
        %v758 = vrcp.pop %v719
        %v759 = vmul.f32 1.0, %v758
        %v760 = vrcp.pop %v720
        %v761 = vmul.f32 1.0, %v760
        %v762 = vrcp.pop %v721
        %v763 = vmul.f32 1.0, %v762
        %v764 = vrcp.pop %v722
        %v765 = vmul.f32 1.0, %v764
        %v766 = vrcp.pop %v723
        %v767 = vmul.f32 1.0, %v766
        %v768 = vmul.f32 %v550, %v725
        %v769 = vmul.f32 %v553, %v727
        %v770 = vmul.f32 %v558, %v729
        %v771 = vmul.f32 %v561, %v731
        %v772 = vmul.f32 %v566, %v733
        %v773 = vmul.f32 %v569, %v735
        %v774 = vmul.f32 %v574, %v737
        %v775 = vmul.f32 %v577, %v739
        %v776 = vmul.f32 %v582, %v741
        %v777 = vmul.f32 %v585, %v743
        %v778 = vmul.f32 %v590, %v745
        %v779 = vmul.f32 %v593, %v747
        %v780 = vmul.f32 %v598, %v749
        %v781 = vmul.f32 %v601, %v751
        %v782 = vmul.f32 %v606, %v753
        %v783 = vmul.f32 %v609, %v755
        %v784 = vmul.f32 %v614, %v757
        %v785 = vmul.f32 %v617, %v759
        %v786 = vmul.f32 %v622, %v761
        %v787 = vmul.f32 %v625, %v763
        %v788 = vmul.f32 %v630, %v765
        %v789 = vmul.f32 %v633, %v767
        %vm790 = vcmask 31744
        %791 = vst.msk [vmem:[%s371] sm:$0xff] %vm790, %v784
        %792 = vst.msk [vmem:[%s371 + $0x8] sm:$0xff] %vm790, %v785
        %793 = vst.msk [vmem:[%s371 + $0x10] sm:$0xff] %vm790, %v786
        %794 = vst.msk [vmem:[%s371 + $0x18] sm:$0xff] %vm790, %v787
        %v795 = vpack.c.bf16 %v769, %v768
        %v796 = vpack.c.bf16 %v771, %v770
        %v797 = vpack.c.bf16 %v773, %v772
        %v798 = vpack.c.bf16 %v775, %v774
        %v799 = vpack.c.bf16 %v777, %v776
        %v800 = vpack.c.bf16 %v779, %v778
        %v801 = vpack.c.bf16 %v781, %v780
        %v802 = vpack.c.bf16 %v783, %v782
        %v811 = vunpack.c.l.b16 %v795
        %v812 = vunpack.c.h.b16 %v795
        %v813 = vunpack.c.l.b16 %v796
        %v814 = vunpack.c.h.b16 %v796
        %v815 = vunpack.c.l.b16 %v797
        %v816 = vunpack.c.h.b16 %v797
        %v817 = vunpack.c.l.b16 %v798
        %v818 = vunpack.c.h.b16 %v798
        %v819 = vunpack.c.l.b16 %v799
        %v820 = vunpack.c.h.b16 %v799
        %v821 = vunpack.c.l.b16 %v800
        %v822 = vunpack.c.h.b16 %v800
        %v823 = vunpack.c.l.b16 %v801
        %v824 = vunpack.c.h.b16 %v801
        %v825 = vunpack.c.l.b16 %v802
        %v826 = vunpack.c.h.b16 %v802
        %p827 = scmp.gt.s32.totalorder %s28, 0
        %s828 = scalar_select %p827, 1, 0
        %s829 = scvt.s32.f32 %s828
        %v830 = vstv %s829
        %v831 = vmul.f32 %v788, %v830
        %v832 = vmul.f32 %v789, %v830
        %v833 = vpack.c.bf16 %v832, %v831
        %v835 = vunpack.c.l.b16 %v833
        %v836 = vunpack.c.h.b16 %v833
        %v837 = vpack.c.b16 %v836, %v836
        %v838 = vpack.c.b16 %v823, %v823
        %v839 = vpack.c.b16 %v824, %v824
        %v840 = vpack.c.b16 %v825, %v825
        %v842 = vshrl.u32 %v837, 16
        %v844 = vrot.slane %v842, 7
        %v845 = vshll.u32 %v837, 16
        %v847 = vor.u32 %v844, %v845
        %v849 = vshrl.u32 %v838, 16
        %v851 = vrot.slane %v849, 7
        %v852 = vshll.u32 %v838, 16
        %v854 = vor.u32 %v851, %v852
        %v856 = vshrl.u32 %v839, 16
        %v858 = vrot.slane %v856, 7
        %v859 = vshll.u32 %v839, 16
        %v861 = vor.u32 %v858, %v859
        %v863 = vshrl.u32 %v840, 16
        %v865 = vrot.slane %v863, 7
        %v866 = vshll.u32 %v840, 16
        %v868 = vor.u32 %v865, %v866
        %vm873 = vcmask 1040384
        %vm874 = vsmask.f32 256
        %vm875 = vmand %vm873, %vm874
        %v876 = vsel %vm875, 0, %v847
        %v877 = vsel %vm875, 0, %v854
        %v878 = vsel %vm875, 0, %v861
        %v879 = vsel %vm875, 0, %v868
        %v880 = vpack.c.b16 %v815, %v815
        %v881 = vpack.c.b16 %v816, %v816
        %v882 = vpack.c.b16 %v817, %v817
        %v883 = vpack.c.b16 %v818, %v818
        %v885 = vshrl.u32 %v880, 16
        %v887 = vrot.slane %v885, 7
        %v888 = vshll.u32 %v880, 16
        %v890 = vor.u32 %v887, %v888
        %v892 = vshrl.u32 %v881, 16
        %v894 = vrot.slane %v892, 7
        %v895 = vshll.u32 %v881, 16
        %v897 = vor.u32 %v894, %v895
        %v899 = vshrl.u32 %v882, 16
        %v901 = vrot.slane %v899, 7
        %v902 = vshll.u32 %v882, 16
        %v904 = vor.u32 %v901, %v902
        %v906 = vshrl.u32 %v883, 16
        %v908 = vrot.slane %v906, 7
        %v909 = vshll.u32 %v883, 16
        %v911 = vor.u32 %v908, %v909
        %v916 = vsel %vm875, 0, %v890
        %v917 = vsel %vm875, 0, %v897
        %v918 = vsel %vm875, 0, %v904
        %v919 = vsel %vm875, 0, %v911
        %v920 = vpack.c.b16 %v826, %v826
        %v922 = vshrl.u32 %v920, 16
        %v924 = vrot.slane %v922, 7
        %v925 = vshll.u32 %v920, 16
        %v927 = vor.u32 %v924, %v925
        %v929 = vsel %vm875, 0, %v927
        %v930 = vpack.c.b16 %v835, %v835
        %v931 = vpack.c.b16 %v819, %v819
        %v932 = vpack.c.b16 %v820, %v820
        %v933 = vpack.c.b16 %v821, %v821
        %934 = vrot.lane.b32.xlu0 %v930, 4
        %v935 = vpop.permute.xlu0 %934
        %936 = vrot.lane.b32.xlu0 %v931, 4
        %v937 = vpop.permute.xlu0 %936
        %938 = vrot.lane.b32.xlu0 %v932, 4
        %v939 = vpop.permute.xlu0 %938
        %940 = vrot.lane.b32.xlu0 %v933, 4
        %v941 = vpop.permute.xlu0 %940
        %942 = vrot.lane.b32.xlu0 %v837, 8
        %v943 = vpop.permute.xlu0 %942
        %944 = vrot.lane.b32.xlu0 %v838, 8
        %v945 = vpop.permute.xlu0 %944
        %946 = vrot.lane.b32.xlu0 %v839, 8
        %v947 = vpop.permute.xlu0 %946
        %948 = vrot.lane.b32.xlu0 %v840, 8
        %v949 = vpop.permute.xlu0 %948
        %954 = vrot.lane.b32.xlu0 %v916, 12
        %v955 = vpop.permute.xlu0 %954
        %956 = vrot.lane.b32.xlu0 %v917, 12
        %v957 = vpop.permute.xlu0 %956
        %958 = vrot.lane.b32.xlu0 %v918, 12
        %v959 = vpop.permute.xlu0 %958
        %960 = vrot.lane.b32.xlu0 %v919, 12
        %v961 = vpop.permute.xlu0 %960
        %v962 = vpack.c.b16 %v811, %v811
        %v963 = vpack.c.b16 %v812, %v812
        %v964 = vpack.c.b16 %v813, %v813
        %v965 = vpack.c.b16 %v814, %v814
        %966 = vrot.lane.b32.xlu0 %v962, 16
        %v967 = vpop.permute.xlu0 %966
        %968 = vrot.lane.b32.xlu0 %v963, 16
        %v969 = vpop.permute.xlu0 %968
        %970 = vrot.lane.b32.xlu0 %v964, 16
        %v971 = vpop.permute.xlu0 %970
        %972 = vrot.lane.b32.xlu0 %v965, 16
        %v973 = vpop.permute.xlu0 %972
        %974 = vrot.lane.b32.xlu0 %v880, 20
        %v975 = vpop.permute.xlu0 %974
        %976 = vrot.lane.b32.xlu0 %v881, 20
        %v977 = vpop.permute.xlu0 %976
        %978 = vrot.lane.b32.xlu0 %v882, 20
        %v979 = vpop.permute.xlu0 %978
        %980 = vrot.lane.b32.xlu0 %v883, 20
        %v981 = vpop.permute.xlu0 %980
        %986 = vrot.lane.b32.xlu0 %v877, 24
        %v987 = vpop.permute.xlu0 %986
        %988 = vrot.lane.b32.xlu0 %v878, 24
        %v989 = vpop.permute.xlu0 %988
        %990 = vrot.lane.b32.xlu0 %v879, 24
        %v991 = vpop.permute.xlu0 %990
        %992 = vrot.lane.b32.xlu0 %v929, 24
        %v993 = vpop.permute.xlu0 %992
        %v994 = vpack.c.b16 %v822, %v822
        %995 = vrot.lane.b32.xlu0 %v931, 28
        %v996 = vpop.permute.xlu0 %995
        %997 = vrot.lane.b32.xlu0 %v932, 28
        %v998 = vpop.permute.xlu0 %997
        %999 = vrot.lane.b32.xlu0 %v933, 28
        %v1000 = vpop.permute.xlu0 %999
        %1001 = vrot.lane.b32.xlu0 %v994, 28
        %v1002 = vpop.permute.xlu0 %1001
        %1003 = vrot.lane.b32.xlu0 %v838, 32
        %v1004 = vpop.permute.xlu0 %1003
        %1005 = vrot.lane.b32.xlu0 %v839, 32
        %v1006 = vpop.permute.xlu0 %1005
        %1007 = vrot.lane.b32.xlu0 %v840, 32
        %v1008 = vpop.permute.xlu0 %1007
        %1009 = vrot.lane.b32.xlu0 %v920, 32
        %v1010 = vpop.permute.xlu0 %1009
        %v1013 = vsel %vm790, %v876, %v935
        %v1016 = vsel %vm790, %v877, %v937
        %v1019 = vsel %vm790, %v878, %v939
        %v1022 = vsel %vm790, %v879, %v941
        %v1024 = vsel %vm477, %v1013, %v943
        %v1026 = vsel %vm477, %v1016, %v945
        %v1028 = vsel %vm477, %v1019, %v947
        %v1030 = vsel %vm477, %v1022, %v949
        %vm1031 = vcmask 97280
        %v1033 = vsel %vm1031, %v1024, %v955
        %v1035 = vsel %vm1031, %v1026, %v957
        %v1037 = vsel %vm1031, %v1028, %v959
        %v1039 = vsel %vm1031, %v1030, %v961
        %vm1040 = vcmask 130048
        %v1042 = vsel %vm1040, %v1033, %v967
        %v1044 = vsel %vm1040, %v1035, %v969
        %v1046 = vsel %vm1040, %v1037, %v971
        %v1048 = vsel %vm1040, %v1039, %v973
        %vm1049 = vcmask 162816
        %v1051 = vsel %vm1049, %v1042, %v975
        %v1053 = vsel %vm1049, %v1044, %v977
        %v1055 = vsel %vm1049, %v1046, %v979
        %v1057 = vsel %vm1049, %v1048, %v981
        %vm1058 = vcmask 195584
        %v1060 = vsel %vm1058, %v1051, %v987
        %v1062 = vsel %vm1058, %v1053, %v989
        %v1064 = vsel %vm1058, %v1055, %v991
        %v1066 = vsel %vm1058, %v1057, %v993
        %vm1067 = vcmask 228352
        %v1069 = vsel %vm1067, %v1060, %v996
        %v1071 = vsel %vm1067, %v1062, %v998
        %v1073 = vsel %vm1067, %v1064, %v1000
        %v1075 = vsel %vm1067, %v1066, %v1002
        %vm1076 = vcmask 261120
        %v1078 = vsel %vm1076, %v1069, %v1004
        %v1080 = vsel %vm1076, %v1071, %v1006
        %v1082 = vsel %vm1076, %v1073, %v1008
        %v1084 = vsel %vm1076, %v1075, %v1010
        %v1085 = vld [vmem:[%s4] sm:$0xf]
        %v1086 = vld [vmem:[%s4 + $0x4] sm:$0xf]
        %v1087 = vld [vmem:[%s4 + $0x8] sm:$0xf]
        %v1088 = vld [vmem:[%s4 + $0xc] sm:$0xf]
        %v1089 = vld [vmem:[%s4 + $0x10] sm:$0x3]
        %v1090 = vld [vmem:[%s5] sm:$0x1]
        %v1092 = vlaneseq
        %v1093 = vshrl.u32 %v1092, 7
        %v1094 = vsub.s32 0, %v1093
        %v1095 = vrot.slane %v1090, %v1094
        %v1101 = vunpack.c.l.b16 %v1078
        %v1102 = vunpack.c.l.b16 %v1080
        %v1103 = vunpack.c.l.b16 %v1082
        %v1104 = vunpack.c.l.b16 %v1084
        %v1105 = vpack.c.b16 %v1102, %v1101
        %v1106 = vpack.c.b16 %v1104, %v1103
        %v1112 = vunpack.c.l.b16 %v1085
        %v1113 = vunpack.c.l.b16 %v1086
        %v1114 = vunpack.c.l.b16 %v1087
        %v1115 = vunpack.c.l.b16 %v1088
        %v1116 = vunpack.c.l.b16 %v1089
        %v1117 = vpack.c.b16 %v1113, %v1112
        %v1118 = vpack.c.b16 %v1115, %v1114
        %v1119 = vpack.c.b16 %v1116, %v1116
        %vm1122 = vcmask 293888
        %v1124 = vsel %vm1122, %v1105, 0
        %v1127 = vsel %vm1122, %v1106, 0
        %vm1129 = vcmask 1041408
        %v1131 = vsel %vm1129, %v1119, 0
        %1133 = vmatprep.subr.bf16.mxu0 0
        %1134 = vmatpush1.bf16.msra.mxu0 %v1117
        %1135 = vmatprep.subr.bf16.mxu0 0
        %1136 = vmatpush1.bf16.msra.mxu0 %v1118
        %1137 = vmatprep.subr.bf16.mxu0 0
        %1138 = vmatpush1.bf16.msra.mxu0 %v1131
        %1139 = vmatprep.subr.bf16.mxu0 0
        %1140 = vmatpush1.bf16.msra.mxu0 0
        %1141 = vmatprep.subr.bf16.mxu0 0
        %1142 = vmatpush1.bf16.msra.mxu0 0
        %1143 = vmatprep.subr.bf16.mxu0 0
        %1144 = vmatpush1.bf16.msra.mxu0 0
        %1145 = vmatprep.subr.bf16.mxu0 0
        %1146 = vmatpush1.bf16.msra.mxu0 0
        %1147 = vmatprep.subr.bf16.mxu0 0
        %1148 = vmatpush1.bf16.msra.mxu0 0
        %1149 = vmatprep.subr.bf16.mxu0 0
        %1150 = vmatpush1.bf16.msra.mxu0 0
        %1151 = vmatprep.subr.bf16.mxu0 0
        %1152 = vmatpush1.bf16.msra.mxu0 0
        %1153 = vmatprep.subr.bf16.mxu0 0
        %1154 = vmatpush1.bf16.msra.mxu0 0
        %1155 = vmatprep.subr.bf16.mxu0 0
        %1156 = vmatpush1.bf16.msra.mxu0 0
        %1157 = vmatprep.subr.bf16.mxu0 0
        %1158 = vmatpush1.bf16.msra.mxu0 0
        %1159 = vmatprep.subr.bf16.mxu0 0
        %1160 = vmatpush1.bf16.msra.mxu0 0
        %1161 = vmatprep.subr.bf16.mxu0 0
        %1162 = vmatpush1.bf16.msra.mxu0 0
        %1163 = vmatprep.subr.bf16.mxu0 0
        %1164 = vmatpush1.bf16.msra.mxu0 0
        %1165 = vmatprep.mubr.bf16.mxu0 0
        %1166 = vmatmul.mubr.bf16.gmra.mrb[0].mxu0 %v1124
        %v1167 = vpop.f32.mrb[0].mxu0
        %v1168 = vadd.f32 %v1095, %v1167
        %v1169 = vpop.f32.mrb[0].mxu0
        %v1170 = vpop.f32.mrb[0].mxu0
        %v1171 = vadd.f32 %v1095, %v1170
        %v1172 = vpop.f32.mrb[0].mxu0
        %1173 = vmatprep.mubr.bf16.mxu0 0
        %1174 = vmatmul.mubr.bf16.gmra.mrb[0].mxu0 %v1127
        %v1175 = vpop.f32.mrb[0].mxu0
        %v1176 = vadd.f32 %v1095, %v1175
        %v1177 = vpop.f32.mrb[0].mxu0
        %v1178 = vpop.f32.mrb[0].mxu0
        %v1179 = vadd.f32 %v1095, %v1178
        %v1180 = vpop.f32.mrb[0].mxu0
        %1181 = vdwg.mxu0
        %v1182 = vxor.u32 %v1168, 2147483648
        %v1183 = vxor.u32 %v1171, 2147483648
        %v1184 = vxor.u32 %v1176, 2147483648
        %v1185 = vxor.u32 %v1179, 2147483648
        %v1186 = vmul.f32 %v1182, 1.442695
        %v1187 = vpow.pop %v1186
        %v1188 = vmul.f32 %v1183, 1.442695
        %v1189 = vpow.pop %v1188
        %v1190 = vmul.f32 %v1184, 1.442695
        %v1191 = vpow.pop %v1190
        %v1192 = vmul.f32 %v1185, 1.442695
        %v1193 = vpow.pop %v1192
        %v1194 = vadd.f32 %v1187, 1.0
        %v1195 = vadd.f32 %v1189, 1.0
        %v1196 = vadd.f32 %v1191, 1.0
        %v1197 = vadd.f32 %v1193, 1.0
        %v1198 = vrcp.pop %v1194
        %v1199 = vmul.f32 1.0, %v1198
        %v1200 = vrcp.pop %v1195
        %v1201 = vmul.f32 1.0, %v1200
        %v1202 = vrcp.pop %v1196
        %v1203 = vmul.f32 1.0, %v1202
        %v1204 = vrcp.pop %v1197
        %v1205 = vmul.f32 1.0, %v1204
        %v1206 = vmul.f32 %v1168, %v1199
        %v1207 = vmul.f32 %v1171, %v1201
        %v1208 = vmul.f32 %v1176, %v1203
        %v1209 = vmul.f32 %v1179, %v1205
        %s1210 = scalar_lea.vmem %s371, 32 [#allocation6]
        %1211 = vst.msk [vmem:[%s1210] sm:$0xff] %vm790, %v1206
        %1212 = vst.msk [vmem:[%s1210 + $0x8] sm:$0xff] %vm790, %v1207
        %1213 = vst.msk [vmem:[%s1210 + $0x10] sm:$0xff] %vm790, %v1208
        %1214 = vst.msk [vmem:[%s1210 + $0x18] sm:$0xff] %vm790, %v1209
        %s1215 = sand.u32 %s197, 1
        %s1216 = sand.u32 %s197, 1
        %s1217 = smul.addr %s1216, 64
        %s1218 = scalar_lea.vmem [#allocation6], %s1217
        // Predicated region
        $region53: #{tpu_custom_call.1} parent=43 // pred_check
          %p1219 = pneg %p207
        $region54: #{tpu_custom_call.1} parent=43 // pred_check_branch
          %1221 = sbr.rel (%p1219) target = $region56
        $region55: #{tpu_custom_call.1} parent=43 // pred_region
          %s1222 = smul.u32 2, %s27
          %s1223 = smul.u32 4, %s28
          %s1224 = smul.addr %s1222, 8
          %s1225 = sadd.s32 %s1223, %s1224
          %s1226 = smul.addr %s1225, 8
          %s1227 = scalar_lea.vmem %s6, %s1226
          // Predicated region
          $region57: #{tpu_custom_call.1} parent=55 // pred_check
            _
          $region58: #{tpu_custom_call.1} parent=55 // pred_check_branch
            %1229 = sbr.rel (0) target = $region60
          $region59: #{tpu_custom_call.1} parent=55 // pred_region
            // Predicated region
            $region61: #{tpu_custom_call.1} parent=59 // pred_check
              _
            $region62: #{tpu_custom_call.1} parent=59 // pred_check_branch
              %1231 = sbr.rel (0) target = $region64
            $region63: #{tpu_custom_call.1} parent=59 // pred_region
              // Predicated region
              $region76: #{tpu_custom_call.1} parent=63 // pred_check
                _
              $region77: #{tpu_custom_call.1} parent=63 // pred_check_branch
                %1260 = sbr.rel (0) target = $region79
              $region78: #{tpu_custom_call.1} parent=63 // pred_region
                loop: start=0, step=1, limit=1
                $region80: #{tpu_custom_call.1} parent=78 // loop_pre_header
                  _
                $region81: #{tpu_custom_call.1} parent=78 // loop_header
                  %s1262 = sphi 0, %s1266
                  %p1263 = scmp.ge.s32.totalorder %s1262, 1
                  %s1267 = sphi %s1218, %s1218
                  %s1268 = sphi %s1227, %s1227
                $region82: #{tpu_custom_call.1} parent=78 // loop_header_branch
                  %1265 = sbr.rel (%p1263) target = $region86
                $region83: #{tpu_custom_call.1} parent=78 // loop_body
                  %v1269 = vld [vmem:[%s1267] sm:$0xff]
                  %1270 = vst [vmem:[%s1268] sm:$0xff] %v1269
                  %v1271 = vld [vmem:[%s1267 + $0x8] sm:$0xff]
                  %1272 = vst [vmem:[%s1268 + $0x8] sm:$0xff] %v1271
                  %v1273 = vld [vmem:[%s1267 + $0x10] sm:$0xff]
                  %1274 = vst [vmem:[%s1268 + $0x10] sm:$0xff] %v1273
                  %v1275 = vld [vmem:[%s1267 + $0x18] sm:$0xff]
                  %1276 = vst [vmem:[%s1268 + $0x18] sm:$0xff] %v1275
                  %v1277 = vld [vmem:[%s1267 + $0x20] sm:$0xff]
                  %1278 = vst [vmem:[%s1268 + $0x40] sm:$0xff] %v1277
                  %v1279 = vld [vmem:[%s1267 + $0x28] sm:$0xff]
                  %1280 = vst [vmem:[%s1268 + $0x48] sm:$0xff] %v1279
                  %v1281 = vld [vmem:[%s1267 + $0x30] sm:$0xff]
                  %1282 = vst [vmem:[%s1268 + $0x50] sm:$0xff] %v1281
                  %v1283 = vld [vmem:[%s1267 + $0x38] sm:$0xff]
                  %1284 = vst [vmem:[%s1268 + $0x58] sm:$0xff] %v1283
                $region84: #{tpu_custom_call.1} parent=78 // loop_footer
                  %s1266 = sadd.s32 1, %s1262
                $region85: #{tpu_custom_call.1} parent=78 // loop_footer_branch
                  %1261 = sbr.rel target = $region81
                $region86: #{tpu_custom_call.1} parent=78 // loop_exit
                  _
              $region79: #{tpu_custom_call.1} parent=63 // pred_fallthru
                _
              // Predicated region
              $region87: #{tpu_custom_call.1} parent=63 // pred_check
                _
              $region88: #{tpu_custom_call.1} parent=63 // pred_check_branch
                %1286 = sbr.rel target = $region90
              $region89: #{tpu_custom_call.1} parent=63 // pred_region
                _
              $region90: #{tpu_custom_call.1} parent=63 // pred_fallthru
                _
            $region64: #{tpu_custom_call.1} parent=59 // pred_fallthru
              _
            // Predicated region
            $region65: #{tpu_custom_call.1} parent=59 // pred_check
              _
            $region66: #{tpu_custom_call.1} parent=59 // pred_check_branch
              %1233 = sbr.rel target = $region68
            $region67: #{tpu_custom_call.1} parent=59 // pred_region
              loop: start=0, step=1, limit=1
              $region69: #{tpu_custom_call.1} parent=67 // loop_pre_header
                _
              $region70: #{tpu_custom_call.1} parent=67 // loop_header
                %s1236 = sphi 0, %s1240
                %p1237 = scmp.ge.s32.totalorder %s1236, 1
                %s1241 = sphi %s1218, %s1218
                %s1242 = sphi %s1227, %s1227
              $region71: #{tpu_custom_call.1} parent=67 // loop_header_branch
                %1239 = sbr.rel (%p1237) target = $region75
              $region72: #{tpu_custom_call.1} parent=67 // loop_body
                %v1243 = vld [vmem:[%s1241] sm:$0xff]
                %1244 = vst [vmem:[%s1242] sm:$0xff] %v1243
                %v1245 = vld [vmem:[%s1241 + $0x8] sm:$0xff]
                %1246 = vst [vmem:[%s1242 + $0x8] sm:$0xff] %v1245
                %v1247 = vld [vmem:[%s1241 + $0x10] sm:$0xff]
                %1248 = vst [vmem:[%s1242 + $0x10] sm:$0xff] %v1247
                %v1249 = vld [vmem:[%s1241 + $0x18] sm:$0xff]
                %1250 = vst [vmem:[%s1242 + $0x18] sm:$0xff] %v1249
                %v1251 = vld [vmem:[%s1241 + $0x20] sm:$0xff]
                %1252 = vst [vmem:[%s1242 + $0x40] sm:$0xff] %v1251
                %v1253 = vld [vmem:[%s1241 + $0x28] sm:$0xff]
                %1254 = vst [vmem:[%s1242 + $0x48] sm:$0xff] %v1253
                %v1255 = vld [vmem:[%s1241 + $0x30] sm:$0xff]
                %1256 = vst [vmem:[%s1242 + $0x50] sm:$0xff] %v1255
                %v1257 = vld [vmem:[%s1241 + $0x38] sm:$0xff]
                %1258 = vst [vmem:[%s1242 + $0x58] sm:$0xff] %v1257
              $region73: #{tpu_custom_call.1} parent=67 // loop_footer
                %s1240 = sadd.s32 1, %s1236
              $region74: #{tpu_custom_call.1} parent=67 // loop_footer_branch
                %1235 = sbr.rel target = $region70
              $region75: #{tpu_custom_call.1} parent=67 // loop_exit
                _
            $region68: #{tpu_custom_call.1} parent=59 // pred_fallthru
              _
          $region60: #{tpu_custom_call.1} parent=55 // pred_fallthru
            _
          %1287 = vnop
        $region56: #{tpu_custom_call.1} parent=43 // pred_fallthru
          _
      $region44: #{tpu_custom_call.1} parent=5 // pred_fallthru
        _
      %p1288 = scmp.le.s32.totalorder 2, %s18
      // Predicated region
      $region91: #{tpu_custom_call.1} parent=5 // pred_check
        %p1289 = pneg %p1288
      $region92: #{tpu_custom_call.1} parent=5 // pred_check_branch
        %1291 = sbr.rel (%p1289) target = $region94
      $region93: #{tpu_custom_call.1} parent=5 // pred_region
        %s1292 = ssub.s32 %s18, 2
        // Predicated region
        $region95: #{tpu_custom_call.1} parent=93 // pred_check
          %p1293 = pneg %p213
        $region96: #{tpu_custom_call.1} parent=93 // pred_check_branch
          %1295 = sbr.rel (%p1293) target = $region98
        $region97: #{tpu_custom_call.1} parent=93 // pred_region
          %s1296 = sand.u32 %s198, 1
          %s1297 = sand.u32 %s198, 1
          %s1298 = smul.addr %s1297, 64
          %s1299 = scalar_lea.vmem [#allocation6], %s1298
        $region98: #{tpu_custom_call.1} parent=93 // pred_fallthru
          _
      $region94: #{tpu_custom_call.1} parent=5 // pred_fallthru
        _
    $region6: #{tpu_custom_call.1} parent=1 // loop_footer
      %s22 = sadd.s32 1, %s18
    $region7: #{tpu_custom_call.1} parent=1 // loop_footer_branch
      %17 = sbr.rel target = $region3
    $region8: #{tpu_custom_call.1} parent=1 // loop_exit
      _
    %1300 = vsyncpa [#allocation3], 1
    %s1301 = scalar_lea.sflag [#allocation3], 1
    %1302 = vsyncpa %s1301, 1
    %1303 = vsyncpa [#allocation5], 1
    %s1304 = scalar_lea.sflag [#allocation5], 1
    %1305 = vsyncpa %s1304, 1

</llo_original>
